<compile_context>
chip_gen: v6e
topology: v6e:2x2x1
jax: 0.10.0
libtpu: 0.0.40
codegen_flags: <defaults>
</compile_context>

<pallas_src>
import functools

import jax
import jax.numpy as jnp
from jax import lax
from jax.experimental import pallas as pl
from jax.experimental.pallas import tpu as pltpu

NEG_SLOPE = 0.01  # nn.LeakyReLU default negative_slope


def _leaky(x):
    return jnp.where(x >= 0, x, NEG_SLOPE * x)


# --------------------------------------------------------------------------------------
# Fused kernel: one grid step == one image, channel-as-sublane / padded-spatial-as-lane.
# --------------------------------------------------------------------------------------
def _fused_block_kernel(xp_ref, w1_ref, w2_ref, w3_ref, *rest,
                        K, Wp, L, center, downsample):
    """
    xp_ref : (1, Cin, EXT)   bf16  zero-padded image, spatial flattened as hp*Wp + wp on lanes
    w1_ref : (mid, Cin)      bf16  conv1 1x1 weight (native PyTorch O,I orientation)
    w2_ref : (K*K, mid, mid) f32   conv2 taps, index kh*K+kw -> (out, in)
    w3_ref : (Cout, mid)     f32   conv3 1x1 weight
    wds_ref: (Cout, Cin)     bf16  downsample 1x1 weight (only when downsample=True)
    o_ref  : (1, Cout, L)    f32   stride-1 output on the flattened padded grid
                                   (wrapper crops wrap columns + applies stride)
    """
    if downsample:
        wds_ref, o_ref = rest
    else:
        wds_ref = None
        (o_ref,) = rest

    xp = xp_ref[0]                                                     # (Cin, EXT) bf16

    # conv1 (1x1, bias-free) + LeakyReLU on the padded grid: border & slack lanes stay 0
    # because w1 @ 0 == 0 and leaky(0) == 0, so h1p is exactly the zero-padded h1.
    h1p = _leaky(jnp.dot(w1_ref[...], xp,
                         preferred_element_type=jnp.float32))          # (mid, EXT) f32

    # conv2 (KxK, stride 1, padding already baked into h1p): K*K lane-shifted slices,
    # accumulated in f32.  Lane positions q = h*Wp + w with w >= W1 are garbage from the
    # width wrap; they are cropped in the wrapper.
    mid_out = w2_ref.shape[1]
    acc = jnp.zeros((mid_out, L), jnp.float32)
    for kh in range(K):
        for kw in range(K):
            off = kh * Wp + kw
            acc = acc + jnp.dot(w2_ref[kh * K + kw], h1p[:, off:off + L],
                                preferred_element_type=jnp.float32)
    h2 = _leaky(acc)                                                   # (mid, L) f32

    # conv3 (1x1) + skip (1x1 downsample conv or identity) + residual add + LeakyReLU.
    out = jnp.dot(w3_ref[...], h2, preferred_element_type=jnp.float32)  # (Cout, L)
    xc = xp[:, center:center + L]              # original pixels at the tap centers (bf16)
    if downsample:
        out = out + jnp.dot(wds_ref[...], xc, preferred_element_type=jnp.float32)
    else:
        out = out + xc.astype(jnp.float32)
    o_ref[0] = _leaky(out).astype(o_ref.dtype)


# --------------------------------------------------------------------------------------
# Forward wrapper: layout plumbing only (one input pad, one output strided slice).
# --------------------------------------------------------------------------------------
def snres_block_forward(x_nchw, params, *, kernel_size, stride):
    w1, w2, w3, wds = params                  # PyTorch OIHW, already spectral-normalized
    N, Cin, H, W = x_nchw.shape
    mid = w1.shape[0]
    Cout = w3.shape[0]
    K, s, pad = kernel_size, stride, 1        # the PyTorch module hard-codes padding=1
    is_downsample = Cin != Cout
    if not is_downsample and s != 1:
        raise ValueError("identity skip requires stride == 1 (matches the PyTorch module)")

    Hp, Wp = H + 2 * pad, W + 2 * pad
    H1, W1 = Hp - K + 1, Wp - K + 1           # stride-1 conv2 output extent
    L = H1 * Wp                               # lanes computed per image (wrap cols cropped below)
    center = pad * Wp + pad                   # flattened padded index of original pixel (0, 0)
    ext = max(Hp * Wp + K - 1, center + L)    # zero slack so no slice ever goes out of bounds

    # Input prep: spatial zero-pad, flatten HW onto the lane axis, slack-pad, cast to bf16.
    xp = jnp.pad(x_nchw, ((0, 0), (0, 0), (pad, pad), (pad, pad))).reshape(N, Cin, Hp * Wp)
    xp = jnp.pad(xp, ((0, 0), (0, 0), (0, ext - Hp * Wp))).astype(jnp.bfloat16)

    # Weight prep (native O,I orientation -> no activation transposes anywhere).
    w1m = w1.reshape(mid, Cin).astype(jnp.bfloat16)
    w2t = jnp.transpose(w2, (2, 3, 0, 1)).reshape(K * K, mid, mid).astype(jnp.float32)
    w3m = w3.reshape(Cout, mid).astype(jnp.float32)

    inputs = [xp, w1m, w2t, w3m]
    in_specs = [
        pl.BlockSpec((1, Cin, ext), lambda n: (n, 0, 0)),
        pl.BlockSpec((mid, Cin), lambda n: (0, 0)),
        pl.BlockSpec((K * K, mid, mid), lambda n: (0, 0, 0)),
        pl.BlockSpec((Cout, mid), lambda n: (0, 0)),
    ]
    if is_downsample:
        inputs.append(wds.reshape(Cout, Cin).astype(jnp.bfloat16))
        in_specs.append(pl.BlockSpec((Cout, Cin), lambda n: (0, 0)))

    kern = functools.partial(_fused_block_kernel, K=K, Wp=Wp, L=L, center=center,
                             downsample=is_downsample)

    out_full = pl.pallas_call(
        kern,
        out_shape=jax.ShapeDtypeStruct((N, Cout, L), jnp.float32),
        grid=(N,),
        in_specs=in_specs,
        out_specs=pl.BlockSpec((1, Cout, L), lambda n: (n, 0, 0)),
        compiler_params=pltpu.CompilerParams(dimension_semantics=("parallel",)),
    )(*inputs)

    # Crop the width-wrap garbage columns and apply the stride
    # (strided conv == subsampled stride-1 conv).  Result is already NCHW.
    return out_full.reshape(N, Cout, H1, Wp)[:, :, ::s, 0:W1:s]


# --------------------------------------------------------------------------------------
# Parameter glue: spectral normalization (power iteration), mirrors nn.utils.spectral_norm
# weight scaling (weight viewed as (out, in*kH*kW), divided by its top singular value).
# TODO(synk): torch persists `u` across forwards with 1 iteration/call; we run a fixed
#             number of iterations from a deterministic init instead.
# --------------------------------------------------------------------------------------
def spectral_normalize(w, n_iters=10):
    O = w.shape[0]
    mat = w.reshape(O, -1)
    u = jnp.ones((O,), jnp.float32) / jnp.sqrt(jnp.float32(O))
    v = None
    for _ in range(n_iters):
        v = mat.T @ u
        v = v / (jnp.linalg.norm(v) + 1e-12)
        u = mat @ v
        u = u / (jnp.linalg.norm(u) + 1e-12)
    sigma = u @ (mat @ v)
    return w / sigma


# --------------------------------------------------------------------------------------
# Pure-JAX references for the correctness check.
# --------------------------------------------------------------------------------------
def _ref_block(x, w1, w2, w3, wds, *, kernel_size, stride):
    dn = ("NCHW", "OIHW", "NCHW")
    hp = lax.Precision.HIGHEST
    out = _leaky(lax.conv_general_dilated(x, w1, (1, 1), "VALID",
                                          dimension_numbers=dn, precision=hp))
    out = _leaky(lax.conv_general_dilated(out, w2, (stride, stride), [(1, 1), (1, 1)],
                                          dimension_numbers=dn, precision=hp))
    out = lax.conv_general_dilated(out, w3, (1, 1), "VALID",
                                   dimension_numbers=dn, precision=hp)
    skip = x
    if x.shape[1] != w3.shape[0]:
        skip = lax.conv_general_dilated(x, wds, (stride, stride), "VALID",
                                        dimension_numbers=dn, precision=hp)
    return _leaky(out + skip)


def snres_block_ref_f32(x, w1, w2, w3, wds, **kw):
    return _ref_block(x, w1, w2, w3, wds, **kw)


def snres_block_ref_matched(x, w1, w2, w3, wds, **kw):
    # Mirrors the kernel's dtype plan: x, w1, wds are bf16-quantized (bf16 x bf16 products are
    # exact in f32, matching the MXU's f32 accumulation); w2, w3 and intermediates stay f32.
    q = lambda a: a.astype(jnp.bfloat16).astype(jnp.float32)
    return _ref_block(q(x), q(w1), w2, w3, q(wds), **kw)


if __name__ == "__main__":
    # Module config: SNResBlock(in_channels=4, out_channels=16, kernel_size=3, stride=1)
    in_channels, out_channels, kernel_size, stride = 4, 16, 3, 1
    expansion = 4
    mid = out_channels // expansion
    N, H, W = 2, 16, 16

    key = jax.random.PRNGKey(0)
    k1, k2, k3, k4, kx = jax.random.split(key, 5)
    w1 = 0.1 * jax.random.normal(k1, (mid, in_channels, 1, 1), jnp.float32)
    w2 = 0.1 * jax.random.normal(k2, (mid, mid, kernel_size, kernel_size), jnp.float32)
    w3 = 0.1 * jax.random.normal(k3, (out_channels, mid, 1, 1), jnp.float32)
    wds = 0.1 * jax.random.normal(k4, (out_channels, in_channels, 1, 1), jnp.float32)

    # spectral_norm weight scaling (parameter setup glue)
    w1, w2, w3, wds = (spectral_normalize(w1), spectral_normalize(w2),
                       spectral_normalize(w3), spectral_normalize(wds))

    x = jax.random.normal(kx, (N, in_channels, H, W), jnp.float32)

    fwd = jax.jit(functools.partial(snres_block_forward,
                                    kernel_size=kernel_size, stride=stride))
    out = jax.block_until_ready(fwd(x, (w1, w2, w3, wds)))

    ref_m = snres_block_ref_matched(x, w1, w2, w3, wds,
                                    kernel_size=kernel_size, stride=stride)
    ref_f = snres_block_ref_f32(x, w1, w2, w3, wds,
                                kernel_size=kernel_size, stride=stride)

    assert out.shape == ref_m.shape == (N, out_channels, H, W), (out.shape, ref_m.shape)
    err_m = float(jnp.max(jnp.abs(out - ref_m)))
    err_f = float(jnp.max(jnp.abs(out - ref_f)))
    # tight check vs the dtype-matched reference; loose check vs the pure-f32 module math
    assert jnp.allclose(out, ref_m, atol=1e-4, rtol=1e-4), err_m
    assert jnp.allclose(out, ref_f, atol=5e-2, rtol=5e-2), err_f

    print("KERNEL_OK")
</pallas_src>

<mosaic_0001>
module attributes {stable_mosaic.version = 11 : i64} {
  func.func @_fused_block_kernel(%arg0: i32, %arg1: memref<1x4x326xbf16, #tpu.memory_space<vmem>>, %arg2: memref<4x4xbf16, #tpu.memory_space<vmem>>, %arg3: memref<9x4x4xf32, #tpu.memory_space<vmem>>, %arg4: memref<16x4xf32, #tpu.memory_space<vmem>>, %arg5: memref<16x4xbf16, #tpu.memory_space<vmem>>, %arg6: memref<1x16x288xf32, #tpu.memory_space<vmem>>) attributes {dimension_semantics = [#tpu.dimension_semantics<parallel>], iteration_bounds = array<i64: 2>, scalar_prefetch = 0 : i64, scratch_operands = 0 : i64, tpu.core_type = #tpu.core_type<tc>, window_params = [{transform_indices = @transform_0, window_bounds = array<i64: 1, 4, 326>}, {pipeline_mode = #tpu.pipeline_mode<synchronous>, transform_indices = @transform_1, window_bounds = array<i64: 4, 4>}, {pipeline_mode = #tpu.pipeline_mode<synchronous>, transform_indices = @transform_2, window_bounds = array<i64: 9, 4, 4>}, {pipeline_mode = #tpu.pipeline_mode<synchronous>, transform_indices = @transform_3, window_bounds = array<i64: 16, 4>}, {pipeline_mode = #tpu.pipeline_mode<synchronous>, transform_indices = @transform_4, window_bounds = array<i64: 16, 4>}, {transform_indices = @transform_5, window_bounds = array<i64: 1, 16, 288>}]} {
    %c0 = arith.constant 0 : index
    %c0_0 = arith.constant 0 : index
    %c0_1 = arith.constant 0 : index
    %0 = vector.load %arg1[%c0, %c0_0, %c0_1] : memref<1x4x326xbf16, #tpu.memory_space<vmem>>, vector<1x4x326xbf16>
    %1 = vector.shape_cast %0 : vector<1x4x326xbf16> to vector<4x326xbf16>
    %c0_2 = arith.constant 0 : index
    %c0_3 = arith.constant 0 : index
    %2 = vector.load %arg2[%c0_2, %c0_3] : memref<4x4xbf16, #tpu.memory_space<vmem>>, vector<4x4xbf16>
    %cst = arith.constant dense<0.000000e+00> : vector<4x326xf32>
    %3 = tpu.matmul %2, %1, %cst {dimension_numbers = #tpu.dot_dimension_numbers<[1], [0], [0], [1], [0, 0, 1, 1], [], []>} : vector<4x4xbf16>, vector<4x326xbf16>, vector<4x326xf32> -> vector<4x326xf32>
    %cst_4 = arith.constant 0.000000e+00 : f32
    %4 = vector.broadcast %cst_4 : f32 to vector<4x326xf32>
    %5 = arith.cmpf oge, %3, %4 : vector<4x326xf32>
    %cst_5 = arith.constant 0.00999999977 : f32
    %6 = vector.broadcast %cst_5 : f32 to vector<4x326xf32>
    %7 = arith.mulf %6, %3 : vector<4x326xf32>
    %8 = arith.select %5, %3, %7 : vector<4x326xi1>, vector<4x326xf32>
    %cst_6 = arith.constant 0.000000e+00 : f32
    %9 = vector.broadcast %cst_6 : f32 to vector<4x288xf32>
    %c0_7 = arith.constant 0 : index
    %c0_8 = arith.constant 0 : index
    %c0_9 = arith.constant 0 : index
    %10 = vector.load %arg3[%c0_7, %c0_8, %c0_9] : memref<9x4x4xf32, #tpu.memory_space<vmem>>, vector<1x4x4xf32>
    %11 = vector.shape_cast %10 : vector<1x4x4xf32> to vector<4x4xf32>
    %12 = vector.extract_strided_slice %8 {offsets = [0, 0], sizes = [4, 288], strides = [1, 1]} : vector<4x326xf32> to vector<4x288xf32>
    %cst_10 = arith.constant dense<0.000000e+00> : vector<4x288xf32>
    %13 = tpu.matmul %11, %12, %cst_10 {dimension_numbers = #tpu.dot_dimension_numbers<[1], [0], [0], [1], [0, 0, 1, 1], [], []>} : vector<4x4xf32>, vector<4x288xf32>, vector<4x288xf32> -> vector<4x288xf32>
    %14 = arith.addf %9, %13 : vector<4x288xf32>
    %c1 = arith.constant 1 : index
    %c0_11 = arith.constant 0 : index
    %c0_12 = arith.constant 0 : index
    %15 = vector.load %arg3[%c1, %c0_11, %c0_12] : memref<9x4x4xf32, #tpu.memory_space<vmem>>, vector<1x4x4xf32>
    %16 = vector.shape_cast %15 : vector<1x4x4xf32> to vector<4x4xf32>
    %17 = vector.extract_strided_slice %8 {offsets = [0, 1], sizes = [4, 288], strides = [1, 1]} : vector<4x326xf32> to vector<4x288xf32>
    %cst_13 = arith.constant dense<0.000000e+00> : vector<4x288xf32>
    %18 = tpu.matmul %16, %17, %cst_13 {dimension_numbers = #tpu.dot_dimension_numbers<[1], [0], [0], [1], [0, 0, 1, 1], [], []>} : vector<4x4xf32>, vector<4x288xf32>, vector<4x288xf32> -> vector<4x288xf32>
    %19 = arith.addf %14, %18 : vector<4x288xf32>
    %c2 = arith.constant 2 : index
    %c0_14 = arith.constant 0 : index
    %c0_15 = arith.constant 0 : index
    %20 = vector.load %arg3[%c2, %c0_14, %c0_15] : memref<9x4x4xf32, #tpu.memory_space<vmem>>, vector<1x4x4xf32>
    %21 = vector.shape_cast %20 : vector<1x4x4xf32> to vector<4x4xf32>
    %22 = vector.extract_strided_slice %8 {offsets = [0, 2], sizes = [4, 288], strides = [1, 1]} : vector<4x326xf32> to vector<4x288xf32>
    %cst_16 = arith.constant dense<0.000000e+00> : vector<4x288xf32>
    %23 = tpu.matmul %21, %22, %cst_16 {dimension_numbers = #tpu.dot_dimension_numbers<[1], [0], [0], [1], [0, 0, 1, 1], [], []>} : vector<4x4xf32>, vector<4x288xf32>, vector<4x288xf32> -> vector<4x288xf32>
    %24 = arith.addf %19, %23 : vector<4x288xf32>
    %c3 = arith.constant 3 : index
    %c0_17 = arith.constant 0 : index
    %c0_18 = arith.constant 0 : index
    %25 = vector.load %arg3[%c3, %c0_17, %c0_18] : memref<9x4x4xf32, #tpu.memory_space<vmem>>, vector<1x4x4xf32>
    %26 = vector.shape_cast %25 : vector<1x4x4xf32> to vector<4x4xf32>
    %27 = vector.extract_strided_slice %8 {offsets = [0, 18], sizes = [4, 288], strides = [1, 1]} : vector<4x326xf32> to vector<4x288xf32>
    %cst_19 = arith.constant dense<0.000000e+00> : vector<4x288xf32>
    %28 = tpu.matmul %26, %27, %cst_19 {dimension_numbers = #tpu.dot_dimension_numbers<[1], [0], [0], [1], [0, 0, 1, 1], [], []>} : vector<4x4xf32>, vector<4x288xf32>, vector<4x288xf32> -> vector<4x288xf32>
    %29 = arith.addf %24, %28 : vector<4x288xf32>
    %c4 = arith.constant 4 : index
    %c0_20 = arith.constant 0 : index
    %c0_21 = arith.constant 0 : index
    %30 = vector.load %arg3[%c4, %c0_20, %c0_21] : memref<9x4x4xf32, #tpu.memory_space<vmem>>, vector<1x4x4xf32>
    %31 = vector.shape_cast %30 : vector<1x4x4xf32> to vector<4x4xf32>
    %32 = vector.extract_strided_slice %8 {offsets = [0, 19], sizes = [4, 288], strides = [1, 1]} : vector<4x326xf32> to vector<4x288xf32>
    %cst_22 = arith.constant dense<0.000000e+00> : vector<4x288xf32>
    %33 = tpu.matmul %31, %32, %cst_22 {dimension_numbers = #tpu.dot_dimension_numbers<[1], [0], [0], [1], [0, 0, 1, 1], [], []>} : vector<4x4xf32>, vector<4x288xf32>, vector<4x288xf32> -> vector<4x288xf32>
    %34 = arith.addf %29, %33 : vector<4x288xf32>
    %c5 = arith.constant 5 : index
    %c0_23 = arith.constant 0 : index
    %c0_24 = arith.constant 0 : index
    %35 = vector.load %arg3[%c5, %c0_23, %c0_24] : memref<9x4x4xf32, #tpu.memory_space<vmem>>, vector<1x4x4xf32>
    %36 = vector.shape_cast %35 : vector<1x4x4xf32> to vector<4x4xf32>
    %37 = vector.extract_strided_slice %8 {offsets = [0, 20], sizes = [4, 288], strides = [1, 1]} : vector<4x326xf32> to vector<4x288xf32>
    %cst_25 = arith.constant dense<0.000000e+00> : vector<4x288xf32>
    %38 = tpu.matmul %36, %37, %cst_25 {dimension_numbers = #tpu.dot_dimension_numbers<[1], [0], [0], [1], [0, 0, 1, 1], [], []>} : vector<4x4xf32>, vector<4x288xf32>, vector<4x288xf32> -> vector<4x288xf32>
    %39 = arith.addf %34, %38 : vector<4x288xf32>
    %c6 = arith.constant 6 : index
    %c0_26 = arith.constant 0 : index
    %c0_27 = arith.constant 0 : index
    %40 = vector.load %arg3[%c6, %c0_26, %c0_27] : memref<9x4x4xf32, #tpu.memory_space<vmem>>, vector<1x4x4xf32>
    %41 = vector.shape_cast %40 : vector<1x4x4xf32> to vector<4x4xf32>
    %42 = vector.extract_strided_slice %8 {offsets = [0, 36], sizes = [4, 288], strides = [1, 1]} : vector<4x326xf32> to vector<4x288xf32>
    %cst_28 = arith.constant dense<0.000000e+00> : vector<4x288xf32>
    %43 = tpu.matmul %41, %42, %cst_28 {dimension_numbers = #tpu.dot_dimension_numbers<[1], [0], [0], [1], [0, 0, 1, 1], [], []>} : vector<4x4xf32>, vector<4x288xf32>, vector<4x288xf32> -> vector<4x288xf32>
    %44 = arith.addf %39, %43 : vector<4x288xf32>
    %c7 = arith.constant 7 : index
    %c0_29 = arith.constant 0 : index
    %c0_30 = arith.constant 0 : index
    %45 = vector.load %arg3[%c7, %c0_29, %c0_30] : memref<9x4x4xf32, #tpu.memory_space<vmem>>, vector<1x4x4xf32>
    %46 = vector.shape_cast %45 : vector<1x4x4xf32> to vector<4x4xf32>
    %47 = vector.extract_strided_slice %8 {offsets = [0, 37], sizes = [4, 288], strides = [1, 1]} : vector<4x326xf32> to vector<4x288xf32>
    %cst_31 = arith.constant dense<0.000000e+00> : vector<4x288xf32>
    %48 = tpu.matmul %46, %47, %cst_31 {dimension_numbers = #tpu.dot_dimension_numbers<[1], [0], [0], [1], [0, 0, 1, 1], [], []>} : vector<4x4xf32>, vector<4x288xf32>, vector<4x288xf32> -> vector<4x288xf32>
    %49 = arith.addf %44, %48 : vector<4x288xf32>
    %c8 = arith.constant 8 : index
    %c0_32 = arith.constant 0 : index
    %c0_33 = arith.constant 0 : index
    %50 = vector.load %arg3[%c8, %c0_32, %c0_33] : memref<9x4x4xf32, #tpu.memory_space<vmem>>, vector<1x4x4xf32>
    %51 = vector.shape_cast %50 : vector<1x4x4xf32> to vector<4x4xf32>
    %52 = vector.extract_strided_slice %8 {offsets = [0, 38], sizes = [4, 288], strides = [1, 1]} : vector<4x326xf32> to vector<4x288xf32>
    %cst_34 = arith.constant dense<0.000000e+00> : vector<4x288xf32>
    %53 = tpu.matmul %51, %52, %cst_34 {dimension_numbers = #tpu.dot_dimension_numbers<[1], [0], [0], [1], [0, 0, 1, 1], [], []>} : vector<4x4xf32>, vector<4x288xf32>, vector<4x288xf32> -> vector<4x288xf32>
    %54 = arith.addf %49, %53 : vector<4x288xf32>
    %cst_35 = arith.constant 0.000000e+00 : f32
    %55 = vector.broadcast %cst_35 : f32 to vector<4x288xf32>
    %56 = arith.cmpf oge, %54, %55 : vector<4x288xf32>
    %cst_36 = arith.constant 0.00999999977 : f32
    %57 = vector.broadcast %cst_36 : f32 to vector<4x288xf32>
    %58 = arith.mulf %57, %54 : vector<4x288xf32>
    %59 = arith.select %56, %54, %58 : vector<4x288xi1>, vector<4x288xf32>
    %c0_37 = arith.constant 0 : index
    %c0_38 = arith.constant 0 : index
    %60 = vector.load %arg4[%c0_37, %c0_38] : memref<16x4xf32, #tpu.memory_space<vmem>>, vector<16x4xf32>
    %cst_39 = arith.constant dense<0.000000e+00> : vector<16x288xf32>
    %61 = tpu.matmul %60, %59, %cst_39 {dimension_numbers = #tpu.dot_dimension_numbers<[1], [0], [0], [1], [0, 0, 1, 1], [], []>} : vector<16x4xf32>, vector<4x288xf32>, vector<16x288xf32> -> vector<16x288xf32>
    %62 = vector.extract_strided_slice %1 {offsets = [0, 19], sizes = [4, 288], strides = [1, 1]} : vector<4x326xbf16> to vector<4x288xbf16>
    %c0_40 = arith.constant 0 : index
    %c0_41 = arith.constant 0 : index
    %63 = vector.load %arg5[%c0_40, %c0_41] : memref<16x4xbf16, #tpu.memory_space<vmem>>, vector<16x4xbf16>
    %cst_42 = arith.constant dense<0.000000e+00> : vector<16x288xf32>
    %64 = tpu.matmul %63, %62, %cst_42 {dimension_numbers = #tpu.dot_dimension_numbers<[1], [0], [0], [1], [0, 0, 1, 1], [], []>} : vector<16x4xbf16>, vector<4x288xbf16>, vector<16x288xf32> -> vector<16x288xf32>
    %65 = arith.addf %61, %64 : vector<16x288xf32>
    %cst_43 = arith.constant 0.000000e+00 : f32
    %66 = vector.broadcast %cst_43 : f32 to vector<16x288xf32>
    %67 = arith.cmpf oge, %65, %66 : vector<16x288xf32>
    %cst_44 = arith.constant 0.00999999977 : f32
    %68 = vector.broadcast %cst_44 : f32 to vector<16x288xf32>
    %69 = arith.mulf %68, %65 : vector<16x288xf32>
    %70 = arith.select %67, %65, %69 : vector<16x288xi1>, vector<16x288xf32>
    %c0_45 = arith.constant 0 : index
    %c0_46 = arith.constant 0 : index
    %c0_47 = arith.constant 0 : index
    %71 = vector.load %arg6[%c0_45, %c0_46, %c0_47] : memref<1x16x288xf32, #tpu.memory_space<vmem>>, vector<1x16x288xf32>
    %72 = vector.shape_cast %71 : vector<1x16x288xf32> to vector<16x288xf32>
    %73 = vector.shape_cast %70 : vector<16x288xf32> to vector<1x16x288xf32>
    tpu.vector_store %arg6[%c0_45, %c0_46, %c0_47], %73 {strides = array<i32>} : memref<1x16x288xf32, #tpu.memory_space<vmem>>, vector<1x16x288xf32>,
    return
  }
  func.func @transform_0(%arg0: i32) -> (i32, i32, i32) {
    %c0_i32 = arith.constant 0 : i32
    %c0_i32_0 = arith.constant 0 : i32
    %c0_i32_1 = arith.constant 0 : i32
    return %arg0, %c0_i32, %c0_i32_0 : i32, i32, i32
  }
  func.func @transform_1(%arg0: i32) -> (i32, i32) {
    %c0_i32 = arith.constant 0 : i32
    %c0_i32_0 = arith.constant 0 : i32
    %c0_i32_1 = arith.constant 0 : i32
    return %c0_i32, %c0_i32_0 : i32, i32
  }
  func.func @transform_2(%arg0: i32) -> (i32, i32, i32) {
    %c0_i32 = arith.constant 0 : i32
    %c0_i32_0 = arith.constant 0 : i32
    %c0_i32_1 = arith.constant 0 : i32
    %c0_i32_2 = arith.constant 0 : i32
    return %c0_i32, %c0_i32_0, %c0_i32_1 : i32, i32, i32
  }
  func.func @transform_3(%arg0: i32) -> (i32, i32) {
    %c0_i32 = arith.constant 0 : i32
    %c0_i32_0 = arith.constant 0 : i32
    %c0_i32_1 = arith.constant 0 : i32
    return %c0_i32, %c0_i32_0 : i32, i32
  }
  func.func @transform_4(%arg0: i32) -> (i32, i32) {
    %c0_i32 = arith.constant 0 : i32
    %c0_i32_0 = arith.constant 0 : i32
    %c0_i32_1 = arith.constant 0 : i32
    return %c0_i32, %c0_i32_0 : i32, i32
  }
  func.func @transform_5(%arg0: i32) -> (i32, i32, i32) {
    %c0_i32 = arith.constant 0 : i32
    %c0_i32_0 = arith.constant 0 : i32
    %c0_i32_1 = arith.constant 0 : i32
    return %arg0, %c0_i32, %c0_i32_0 : i32, i32, i32
  }
}

</mosaic_0001>

<llo_original>
// kernel: snres_block_forward.1
$region0: #{snres_block_forward.1}
  #allocation0 [shape = 'u32[]', space=smem, size = 0x4, offset = 0x4, fixed_abs, tag = 'smem constant byte address 0x4 - core index']
  #allocation1 [shape = 'u32[144,128]{1,0:T(1,128)}', space=vmem, size = 0x12000, scoped, tag = 'internal scratch']
  %s0 = inlined_call_operand.vmem [shape: bf16[2,4,326], index: 0, kind: input, shape index: {}]
  %s1 = inlined_call_operand.vmem [shape: bf16[4,4], index: 1, kind: input, shape index: {}]
  %s2 = inlined_call_operand.vmem [shape: f32[9,4,4], index: 2, kind: input, shape index: {}]
  %s3 = inlined_call_operand.vmem [shape: f32[16,4], index: 3, kind: input, shape index: {}]
  %s4 = inlined_call_operand.vmem [shape: bf16[16,4], index: 4, kind: input, shape index: {}]
  %s5 = inlined_call_operand.vmem [shape: f32[2,16,288], index: 5, kind: output, shape index: {}]
  %s6 = sld [smem:[#allocation0]]
  $region53: #{snres_block_forward.1} parent=0
    _
  %s8 = ssub.s32 1, %s6
  %s9 = scalar_select 0, %s8, %s6
  loop: start=0, step=1, limit=4
  $region2: #{snres_block_forward.1} parent=0 // loop_pre_header
    _
  $region3: #{snres_block_forward.1} parent=0 // loop_header
    %s11 = sphi 0, %s15
    %p12 = scmp.ge.s32.totalorder %s11, 4
    %s21 = sphi 0, %s23
    %s24 = sphi 0, %s21
    %s25 = sphi 0, %s24
    %s41 = sphi 0, %s25
    %s45 = sphi 0, %s45
    %s47 = sphi 0, %s45
    %s48 = sphi 0, %s47
    %s62 = sphi 0, %s48
    %s66 = sphi 0, %s66
    %s68 = sphi 0, %s66
    %s69 = sphi 0, %s68
    %s83 = sphi 0, %s69
    %s87 = sphi 0, %s87
    %s89 = sphi 0, %s87
    %s90 = sphi 0, %s89
    %s104 = sphi 0, %s90
    %s108 = sphi 0, %s108
    %s110 = sphi 0, %s108
    %s111 = sphi 0, %s110
    %s125 = sphi 0, %s111
    %s131 = sphi 0, %s133
    %s134 = sphi 0, %s131
    %s135 = sphi 0, %s134
    %s151 = sphi 0, %s135
  $region4: #{snres_block_forward.1} parent=0 // loop_header_branch
    %14 = sbr.rel (%p12) target = $region8
  $region5: #{snres_block_forward.1} parent=0 // loop_body
    %s16 = ssub.s32 %s11, 1
    %s17 = ssub.s32 %s11, 2
    %s18 = sadd.s32 %s11, 1
    %s19 = ssub.s32 %s11, %s18
    %p20 = scmp.eq.s32.totalorder %s19, 0
    %s22 = sadd.s32 %s21, 1
    %s23 = scalar_select %p20, %s21, %s22
    %p26 = pneg %p20
    %p27 = scmp.eq.s32.totalorder %s11, 1
    %p28 = por %p26, %p27
    %p29 = scmp.ne.s32.totalorder %s21, %s24
    %p30 = scmp.eq.s32.totalorder %s11, 0
    %p31 = por %p29, %p30
    %p32 = scmp.ne.s32.totalorder %s21, %s24
    %p33 = scmp.eq.s32.totalorder %s16, 1
    %p34 = por %p32, %p33
    %p35 = scmp.ne.s32.totalorder %s24, %s25
    %p36 = scmp.eq.s32.totalorder %s16, 0
    %p37 = por %p35, %p36
    %p38 = scmp.ne.s32.totalorder %s24, %s25
    %p39 = scmp.eq.s32.totalorder %s17, 1
    %p40 = por %p38, %p39
    %p42 = scmp.ne.s32.totalorder %s25, %s41
    %p43 = scmp.eq.s32.totalorder %s17, 0
    %p44 = por %p42, %p43
    %s46 = sadd.s32 %s45, 1
    %p49 = scmp.eq.s32.totalorder %s11, 1
    %p50 = scmp.ne.s32.totalorder %s45, %s47
    %p51 = scmp.eq.s32.totalorder %s11, 0
    %p52 = por %p50, %p51
    %p53 = scmp.ne.s32.totalorder %s45, %s47
    %p54 = scmp.eq.s32.totalorder %s16, 1
    %p55 = por %p53, %p54
    %p56 = scmp.ne.s32.totalorder %s47, %s48
    %p57 = scmp.eq.s32.totalorder %s16, 0
    %p58 = por %p56, %p57
    %p59 = scmp.ne.s32.totalorder %s47, %s48
    %p60 = scmp.eq.s32.totalorder %s17, 1
    %p61 = por %p59, %p60
    %p63 = scmp.ne.s32.totalorder %s48, %s62
    %p64 = scmp.eq.s32.totalorder %s17, 0
    %p65 = por %p63, %p64
    %s67 = sadd.s32 %s66, 1
    %p70 = scmp.eq.s32.totalorder %s11, 1
    %p71 = scmp.ne.s32.totalorder %s66, %s68
    %p72 = scmp.eq.s32.totalorder %s11, 0
    %p73 = por %p71, %p72
    %p74 = scmp.ne.s32.totalorder %s66, %s68
    %p75 = scmp.eq.s32.totalorder %s16, 1
    %p76 = por %p74, %p75
    %p77 = scmp.ne.s32.totalorder %s68, %s69
    %p78 = scmp.eq.s32.totalorder %s16, 0
    %p79 = por %p77, %p78
    %p80 = scmp.ne.s32.totalorder %s68, %s69
    %p81 = scmp.eq.s32.totalorder %s17, 1
    %p82 = por %p80, %p81
    %p84 = scmp.ne.s32.totalorder %s69, %s83
    %p85 = scmp.eq.s32.totalorder %s17, 0
    %p86 = por %p84, %p85
    %s88 = sadd.s32 %s87, 1
    %p91 = scmp.eq.s32.totalorder %s11, 1
    %p92 = scmp.ne.s32.totalorder %s87, %s89
    %p93 = scmp.eq.s32.totalorder %s11, 0
    %p94 = por %p92, %p93
    %p95 = scmp.ne.s32.totalorder %s87, %s89
    %p96 = scmp.eq.s32.totalorder %s16, 1
    %p97 = por %p95, %p96
    %p98 = scmp.ne.s32.totalorder %s89, %s90
    %p99 = scmp.eq.s32.totalorder %s16, 0
    %p100 = por %p98, %p99
    %p101 = scmp.ne.s32.totalorder %s89, %s90
    %p102 = scmp.eq.s32.totalorder %s17, 1
    %p103 = por %p101, %p102
    %p105 = scmp.ne.s32.totalorder %s90, %s104
    %p106 = scmp.eq.s32.totalorder %s17, 0
    %p107 = por %p105, %p106
    %s109 = sadd.s32 %s108, 1
    %p112 = scmp.eq.s32.totalorder %s11, 1
    %p113 = scmp.ne.s32.totalorder %s108, %s110
    %p114 = scmp.eq.s32.totalorder %s11, 0
    %p115 = por %p113, %p114
    %p116 = scmp.ne.s32.totalorder %s108, %s110
    %p117 = scmp.eq.s32.totalorder %s16, 1
    %p118 = por %p116, %p117
    %p119 = scmp.ne.s32.totalorder %s110, %s111
    %p120 = scmp.eq.s32.totalorder %s16, 0
    %p121 = por %p119, %p120
    %p122 = scmp.ne.s32.totalorder %s110, %s111
    %p123 = scmp.eq.s32.totalorder %s17, 1
    %p124 = por %p122, %p123
    %p126 = scmp.ne.s32.totalorder %s111, %s125
    %p127 = scmp.eq.s32.totalorder %s17, 0
    %p128 = por %p126, %p127
    %s129 = ssub.s32 %s11, %s18
    %p130 = scmp.eq.s32.totalorder %s129, 0
    %s132 = sadd.s32 %s131, 1
    %s133 = scalar_select %p130, %s131, %s132
    %p136 = pneg %p130
    %p137 = scmp.eq.s32.totalorder %s11, 1
    %p138 = por %p136, %p137
    %p139 = scmp.ne.s32.totalorder %s131, %s134
    %p140 = scmp.eq.s32.totalorder %s11, 0
    %p141 = por %p139, %p140
    %p142 = scmp.ne.s32.totalorder %s131, %s134
    %p143 = scmp.eq.s32.totalorder %s16, 1
    %p144 = por %p142, %p143
    %p145 = scmp.ne.s32.totalorder %s134, %s135
    %p146 = scmp.eq.s32.totalorder %s16, 0
    %p147 = por %p145, %p146
    %p148 = scmp.ne.s32.totalorder %s134, %s135
    %p149 = scmp.eq.s32.totalorder %s17, 1
    %p150 = por %p148, %p149
    %p152 = scmp.ne.s32.totalorder %s135, %s151
    %p153 = scmp.eq.s32.totalorder %s17, 0
    %p154 = por %p152, %p153
    %p155 = scmp.le.s32.totalorder 1, %s11
    %p156 = scmp.lt.s32.totalorder %s11, 3
    %p157 = pnand %p155, %p156
    %p158 = pneg %p157
    // Predicated region
    $region9: #{snres_block_forward.1} parent=5 // pred_check
      _
    $region10: #{snres_block_forward.1} parent=5 // pred_check_branch
      %160 = sbr.rel (%p157) target = $region12
    $region11: #{snres_block_forward.1} parent=5 // pred_region
      %s161 = ssub.s32 %s11, 1
      // Predicated region
      $region13: #{snres_block_forward.1} parent=11 // pred_check
        %p162 = pneg %p58
      $region14: #{snres_block_forward.1} parent=11 // pred_check_branch
        %164 = sbr.rel (%p162) target = $region16
      $region15: #{snres_block_forward.1} parent=11 // pred_region
        _
      $region16: #{snres_block_forward.1} parent=11 // pred_fallthru
        _
      // Predicated region
      $region17: #{snres_block_forward.1} parent=11 // pred_check
        %p165 = pneg %p79
      $region18: #{snres_block_forward.1} parent=11 // pred_check_branch
        %167 = sbr.rel (%p165) target = $region20
      $region19: #{snres_block_forward.1} parent=11 // pred_region
        _
      $region20: #{snres_block_forward.1} parent=11 // pred_fallthru
        _
      // Predicated region
      $region21: #{snres_block_forward.1} parent=11 // pred_check
        %p168 = pneg %p100
      $region22: #{snres_block_forward.1} parent=11 // pred_check_branch
        %170 = sbr.rel (%p168) target = $region24
      $region23: #{snres_block_forward.1} parent=11 // pred_region
        _
      $region24: #{snres_block_forward.1} parent=11 // pred_fallthru
        _
      // Predicated region
      $region25: #{snres_block_forward.1} parent=11 // pred_check
        %p171 = pneg %p121
      $region26: #{snres_block_forward.1} parent=11 // pred_check_branch
        %173 = sbr.rel (%p171) target = $region28
      $region27: #{snres_block_forward.1} parent=11 // pred_region
        _
      $region28: #{snres_block_forward.1} parent=11 // pred_fallthru
        _
    $region12: #{snres_block_forward.1} parent=5 // pred_fallthru
      _
    %p174 = scmp.lt.s32.totalorder %s11, 2
    // Predicated region
    $region29: #{snres_block_forward.1} parent=5 // pred_check
      %p175 = pneg %p174
    $region30: #{snres_block_forward.1} parent=5 // pred_check_branch
      %177 = sbr.rel (%p175) target = $region32
    $region31: #{snres_block_forward.1} parent=5 // pred_region
      // Predicated region
      $region33: #{snres_block_forward.1} parent=31 // pred_check
        %p178 = pneg %p31
      $region34: #{snres_block_forward.1} parent=31 // pred_check_branch
        %180 = sbr.rel (%p178) target = $region36
      $region35: #{snres_block_forward.1} parent=31 // pred_region
        %p181 = scmp.lt.s32.totalorder %s11, 1
        %s182 = scalar_select %p181, %s11, 1
        %s183 = smul.addr %s182, 3
        %s184 = smul.addr %s183, 2
        %s185 = scalar_lea.vmem %s0, %s184
      $region36: #{snres_block_forward.1} parent=31 // pred_fallthru
        _
    $region32: #{snres_block_forward.1} parent=5 // pred_fallthru
      _
    %p186 = scmp.le.s32.totalorder 1, %s11
    %p187 = scmp.lt.s32.totalorder %s11, 3
    %p188 = pnand %p186, %p187
    %p189 = pneg %p188
    // Predicated region
    $region37: #{snres_block_forward.1} parent=5 // pred_check
      _
    $region38: #{snres_block_forward.1} parent=5 // pred_check_branch
      %191 = sbr.rel (%p188) target = $region40
    $region39: #{snres_block_forward.1} parent=5 // pred_region
      %s192 = ssub.s32 %s11, 1
      %p193 = scmp.lt.s32.totalorder %s16, 1
      %s194 = scalar_select %p193, %s16, 1
      %s195 = smul.addr %s194, 3
      %s196 = smul.addr %s195, 2
      %s197 = scalar_lea.vmem %s0, %s196
      %p198 = pneg %p37
      %p199 = pneg %p34
      %p200 = pneg %p58
      %p201 = pneg %p55
      %p202 = pneg %p79
      %p203 = pneg %p76
      %p204 = pneg %p100
      %p205 = pneg %p97
      %p206 = pneg %p121
      %p207 = pneg %p118
      %p208 = pneg %p147
      %p209 = pneg %p144
      %p210 = scmp.lt.s32.totalorder %s16, 1
      %s211 = scalar_select %p210, %s16, 1
      %s212 = smul.addr %s211, 6
      %s213 = smul.addr %s212, 8
      %s214 = scalar_lea.vmem %s5, %s213
      %p215 = scmp.lt.s32.totalorder %s16, 1
      %s216 = scalar_select %p215, %s16, 1
      %s217 = smul.addr %s216, 3
      %s218 = smul.addr %s217, 2
      %s219 = scalar_lea.vmem %s0, %s218
      %p220 = scmp.lt.s32.totalorder %s16, 1
      %s221 = scalar_select %p220, %s16, 1
      %s222 = smul.addr %s221, 6
      %s223 = smul.addr %s222, 8
      %s224 = scalar_lea.vmem %s5, %s223
      %v226 = vld [vmem:[%s219] sm:$0x3f]
      %v227 = vld [vmem:[%s1] sm:$0x3]
      %v229 = vcombine.high %v226, %v226
      %v231 = vunpack.c.l.s4 1983009808
      %v232 = vunpack.c.0.s8 %v231
      %v233 = vlaneseq
      %v234 = vshrl.u32 %v233, 7
      %v235 = vsub.s32 %v232, %v234
      %v236 = vrot.slane %v226, %v235
      %v238 = vunpack.c.l.s4 1983009808
      %v239 = vunpack.c.0.s8 %v238
      %v240 = vlaneseq
      %v241 = vshrl.u32 %v240, 7
      %v242 = vsub.s32 %v239, %v241
      %v243 = vrot.slane %v229, %v242
      %v244 = vcombine.high %v236, %v236
      %vm245 = vcmask 31744
      %v247 = vsel %vm245, %v227, 0
      %vm249 = vcmask 1041408
      %v251 = vsel %vm249, %v236, 0
      %v254 = vsel %vm249, %v244, 0
      %v257 = vsel %vm249, %v243, 0
      %259 = vmatprep.subr.bf16.mxu0 0
      %260 = vmatpush1.bf16.msra.mxu0 0
      %261 = vmatprep.subr.bf16.mxu0 0
      %262 = vmatpush1.bf16.msra.mxu0 0
      %263 = vmatprep.subr.bf16.mxu0 0
      %264 = vmatpush1.bf16.msra.mxu0 0
      %265 = vmatprep.subr.bf16.mxu0 0
      %266 = vmatpush1.bf16.msra.mxu0 0
      %267 = vmatprep.subr.bf16.mxu0 0
      %268 = vmatpush1.bf16.msra.mxu0 0
      %269 = vmatprep.subr.bf16.mxu0 0
      %270 = vmatpush1.bf16.msra.mxu0 0
      %271 = vmatprep.subr.bf16.mxu0 0
      %272 = vmatpush1.bf16.msra.mxu0 0
      %273 = vmatprep.subr.bf16.mxu0 %v254
      %274 = vmatpush1.bf16.msra.mxu0 %v251
      %275 = vmatprep.subr.bf16.mxu0 0
      %276 = vmatpush2.bf16.msra.mxu0 0
      %277 = vmatprep.subr.bf16.mxu0 0
      %278 = vmatpush2.bf16.msra.mxu0 0
      %279 = vmatprep.subr.bf16.mxu0 0
      %280 = vmatpush2.bf16.msra.mxu0 0
      %281 = vmatprep.subr.bf16.mxu0 0
      %282 = vmatpush2.bf16.msra.mxu0 0
      %283 = vmatprep.subr.bf16.mxu0 0
      %284 = vmatpush2.bf16.msra.mxu0 0
      %285 = vmatprep.subr.bf16.mxu0 0
      %286 = vmatpush2.bf16.msra.mxu0 0
      %287 = vmatprep.subr.bf16.mxu0 0
      %288 = vmatpush2.bf16.msra.mxu0 0
      %289 = vmatprep.subr.bf16.mxu0 0
      %290 = vmatpush2.bf16.msra.mxu0 0
      %291 = vmatprep.mubr.bf16.mxu0 0
      %292 = vmatmul.mubr.bf16.gmra.mxu0 %v247
      %v293 = vpop.f32.mrf.mxu0
      %v294 = vadd.f32 0.0, %v293
      %v295 = vpop.f32.mrf.mxu0
      %v296 = vadd.f32 0.0, %v295
      %v297 = vpop.f32.mrf.mxu0
      %v298 = vpop.f32.mrf.mxu0
      %299 = vdwg.mxu0
      %300 = vmatprep.subr.bf16.mxu0 0
      %301 = vmatpush1.bf16.msra.mxu0 0
      %302 = vmatprep.subr.bf16.mxu0 0
      %303 = vmatpush1.bf16.msra.mxu0 0
      %304 = vmatprep.subr.bf16.mxu0 0
      %305 = vmatpush1.bf16.msra.mxu0 0
      %306 = vmatprep.subr.bf16.mxu0 0
      %307 = vmatpush1.bf16.msra.mxu0 0
      %308 = vmatprep.subr.bf16.mxu0 0
      %309 = vmatpush1.bf16.msra.mxu0 0
      %310 = vmatprep.subr.bf16.mxu0 0
      %311 = vmatpush1.bf16.msra.mxu0 0
      %312 = vmatprep.subr.bf16.mxu0 0
      %313 = vmatpush1.bf16.msra.mxu0 0
      %314 = vmatprep.subr.bf16.mxu0 0
      %315 = vmatpush1.bf16.msra.mxu0 %v257
      %316 = vmatprep.subr.bf16.mxu0 0
      %317 = vmatpush2.bf16.msra.mxu0 0
      %318 = vmatprep.subr.bf16.mxu0 0
      %319 = vmatpush2.bf16.msra.mxu0 0
      %320 = vmatprep.subr.bf16.mxu0 0
      %321 = vmatpush2.bf16.msra.mxu0 0
      %322 = vmatprep.subr.bf16.mxu0 0
      %323 = vmatpush2.bf16.msra.mxu0 0
      %324 = vmatprep.subr.bf16.mxu0 0
      %325 = vmatpush2.bf16.msra.mxu0 0
      %326 = vmatprep.subr.bf16.mxu0 0
      %327 = vmatpush2.bf16.msra.mxu0 0
      %328 = vmatprep.subr.bf16.mxu0 0
      %329 = vmatpush2.bf16.msra.mxu0 0
      %330 = vmatprep.subr.bf16.mxu0 0
      %331 = vmatpush2.bf16.msra.mxu0 0
      %332 = vmatprep.mubr.bf16.mxu0 0
      %333 = vmatmul.mubr.bf16.gmra.mxu0 %v247
      %v334 = vpop.f32.mrf.mxu0
      %v335 = vadd.f32 0.0, %v334
      %v336 = vpop.f32.mrf.mxu0
      %v337 = vpop.f32.mrf.mxu0
      %v338 = vpop.f32.mrf.mxu0
      %339 = vdwg.mxu0
      %vm340 = vcmp.ge.f32.partialorder %v294, 0.0
      %vm341 = vcmp.ge.f32.partialorder %v296, 0.0
      %vm342 = vcmp.ge.f32.partialorder %v335, 0.0
      %v343 = vmul.f32 %v294, 0.01
      %v344 = vmul.f32 %v296, 0.01
      %v345 = vmul.f32 %v335, 0.01
      %v346 = vsel %vm340, %v294, %v343
      %v347 = vsel %vm341, %v296, %v344
      %v348 = vsel %vm342, %v335, %v345
      %v349 = vld [vmem:[%s2] sm:$0xf]
      %s350 = scalar_lea.vmem %s2, 4
      %v351 = vld [vmem:[%s350] sm:$0xf]
      %355 = vrot.lane.b32.xlu0 %v346, 127
      %v356 = vpop.permute.xlu0 %355
      %357 = vrot.lane.b32.xlu0 %v347, 127
      %v358 = vpop.permute.xlu0 %357
      %359 = vrot.lane.b32.xlu0 %v348, 127
      %v360 = vpop.permute.xlu0 %359
      %vm361 = vcmask 1039360
      %v362 = vsel %vm361, %v356, %v358
      %v363 = vsel %vm361, %v358, %v360
      %v365 = vsel %vm245, %v351, 0
      %vm367 = vcmask 1043456
      %v368 = vsel %vm367, %v362, 0
      %v370 = vsel %vm367, %v363, 0
      %v372 = vsel %vm367, %v360, 0
      %374 = vmatprep.subr.mxu0 0.0
      %375 = vmatpush1.msra.mxu0 0.0
      %376 = vmatprep.subr.mxu0 0.0
      %377 = vmatpush1.msra.mxu0 0.0
      %378 = vmatprep.subr.mxu0 0.0
      %379 = vmatpush1.msra.mxu0 0.0
      %380 = vmatprep.subr.mxu0 0.0
      %381 = vmatpush1.msra.mxu0 0.0
      %382 = vmatprep.subr.mxu0 0.0
      %383 = vmatpush1.msra.mxu0 0.0
      %384 = vmatprep.subr.mxu0 0.0
      %385 = vmatpush1.msra.mxu0 0.0
      %386 = vmatprep.subr.mxu0 0.0
      %387 = vmatpush1.msra.mxu0 0.0
      %388 = vmatprep.subr.mxu0 0.0
      %389 = vmatpush1.msra.mxu0 0.0
      %390 = vmatprep.subr.mxu0 0.0
      %391 = vmatpush1.msra.mxu0 0.0
      %392 = vmatprep.subr.mxu0 0.0
      %393 = vmatpush1.msra.mxu0 0.0
      %394 = vmatprep.subr.mxu0 0.0
      %395 = vmatpush1.msra.mxu0 0.0
      %396 = vmatprep.subr.mxu0 0.0
      %397 = vmatpush1.msra.mxu0 0.0
      %398 = vmatprep.subr.mxu0 0.0
      %399 = vmatpush1.msra.mxu0 0.0
      %400 = vmatprep.subr.mxu0 0.0
      %401 = vmatpush1.msra.mxu0 0.0
      %402 = vmatprep.subr.mxu0 0.0
      %403 = vmatpush1.msra.mxu0 0.0
      %404 = vmatprep.subr.mxu0 %v370
      %405 = vmatpush1.msra.mxu0 %v368
      %406 = vmatprep.subr.mxu0 0.0
      %407 = vmatpush2.msra.mxu0 0.0
      %408 = vmatprep.subr.mxu0 0.0
      %409 = vmatpush2.msra.mxu0 0.0
      %410 = vmatprep.subr.mxu0 0.0
      %411 = vmatpush2.msra.mxu0 0.0
      %412 = vmatprep.subr.mxu0 0.0
      %413 = vmatpush2.msra.mxu0 0.0
      %414 = vmatprep.subr.mxu0 0.0
      %415 = vmatpush2.msra.mxu0 0.0
      %416 = vmatprep.subr.mxu0 0.0
      %417 = vmatpush2.msra.mxu0 0.0
      %418 = vmatprep.subr.mxu0 0.0
      %419 = vmatpush2.msra.mxu0 0.0
      %420 = vmatprep.subr.mxu0 0.0
      %421 = vmatpush2.msra.mxu0 0.0
      %422 = vmatprep.subr.mxu0 0.0
      %423 = vmatpush2.msra.mxu0 0.0
      %424 = vmatprep.subr.mxu0 0.0
      %425 = vmatpush2.msra.mxu0 0.0
      %426 = vmatprep.subr.mxu0 0.0
      %427 = vmatpush2.msra.mxu0 0.0
      %428 = vmatprep.subr.mxu0 0.0
      %429 = vmatpush2.msra.mxu0 0.0
      %430 = vmatprep.subr.mxu0 0.0
      %431 = vmatpush2.msra.mxu0 0.0
      %432 = vmatprep.subr.mxu0 0.0
      %433 = vmatpush2.msra.mxu0 0.0
      %434 = vmatprep.subr.mxu0 0.0
      %435 = vmatpush2.msra.mxu0 0.0
      %436 = vmatprep.subr.mxu0 0.0
      %437 = vmatpush2.msra.mxu0 0.0
      %438 = vmatprep.mubr.f32.mxu0 0.0
      %439 = vmatmul.mubr.f32.gmra.mxu0 %v365
      %v440 = vpop.f32.mrf.mxu0
      %v441 = vadd.f32 0.0, %v440
      %v442 = vpop.f32.mrf.mxu0
      %v443 = vadd.f32 0.0, %v442
      %444 = vdwg.mxu0
      %445 = vmatprep.subr.mxu0 0.0
      %446 = vmatpush1.msra.mxu0 0.0
      %447 = vmatprep.subr.mxu0 0.0
      %448 = vmatpush1.msra.mxu0 0.0
      %449 = vmatprep.subr.mxu0 0.0
      %450 = vmatpush1.msra.mxu0 0.0
      %451 = vmatprep.subr.mxu0 0.0
      %452 = vmatpush1.msra.mxu0 0.0
      %453 = vmatprep.subr.mxu0 0.0
      %454 = vmatpush1.msra.mxu0 0.0
      %455 = vmatprep.subr.mxu0 0.0
      %456 = vmatpush1.msra.mxu0 0.0
      %457 = vmatprep.subr.mxu0 0.0
      %458 = vmatpush1.msra.mxu0 0.0
      %459 = vmatprep.subr.mxu0 0.0
      %460 = vmatpush1.msra.mxu0 0.0
      %461 = vmatprep.subr.mxu0 0.0
      %462 = vmatpush1.msra.mxu0 0.0
      %463 = vmatprep.subr.mxu0 0.0
      %464 = vmatpush1.msra.mxu0 0.0
      %465 = vmatprep.subr.mxu0 0.0
      %466 = vmatpush1.msra.mxu0 0.0
      %467 = vmatprep.subr.mxu0 0.0
      %468 = vmatpush1.msra.mxu0 0.0
      %469 = vmatprep.subr.mxu0 0.0
      %470 = vmatpush1.msra.mxu0 0.0
      %471 = vmatprep.subr.mxu0 0.0
      %472 = vmatpush1.msra.mxu0 0.0
      %473 = vmatprep.subr.mxu0 0.0
      %474 = vmatpush1.msra.mxu0 0.0
      %475 = vmatprep.subr.mxu0 0.0
      %476 = vmatpush1.msra.mxu0 %v372
      %477 = vmatprep.subr.mxu0 0.0
      %478 = vmatpush2.msra.mxu0 0.0
      %479 = vmatprep.subr.mxu0 0.0
      %480 = vmatpush2.msra.mxu0 0.0
      %481 = vmatprep.subr.mxu0 0.0
      %482 = vmatpush2.msra.mxu0 0.0
      %483 = vmatprep.subr.mxu0 0.0
      %484 = vmatpush2.msra.mxu0 0.0
      %485 = vmatprep.subr.mxu0 0.0
      %486 = vmatpush2.msra.mxu0 0.0
      %487 = vmatprep.subr.mxu0 0.0
      %488 = vmatpush2.msra.mxu0 0.0
      %489 = vmatprep.subr.mxu0 0.0
      %490 = vmatpush2.msra.mxu0 0.0
      %491 = vmatprep.subr.mxu0 0.0
      %492 = vmatpush2.msra.mxu0 0.0
      %493 = vmatprep.subr.mxu0 0.0
      %494 = vmatpush2.msra.mxu0 0.0
      %495 = vmatprep.subr.mxu0 0.0
      %496 = vmatpush2.msra.mxu0 0.0
      %497 = vmatprep.subr.mxu0 0.0
      %498 = vmatpush2.msra.mxu0 0.0
      %499 = vmatprep.subr.mxu0 0.0
      %500 = vmatpush2.msra.mxu0 0.0
      %501 = vmatprep.subr.mxu0 0.0
      %502 = vmatpush2.msra.mxu0 0.0
      %503 = vmatprep.subr.mxu0 0.0
      %504 = vmatpush2.msra.mxu0 0.0
      %505 = vmatprep.subr.mxu0 0.0
      %506 = vmatpush2.msra.mxu0 0.0
      %507 = vmatprep.subr.mxu0 0.0
      %508 = vmatpush2.msra.mxu0 0.0
      %509 = vmatprep.mubr.f32.mxu0 0.0
      %510 = vmatmul.mubr.f32.gmra.mxu0 %v365
      %v511 = vpop.f32.mrf.mxu0
      %v512 = vadd.f32 0.0, %v511
      %v513 = vpop.f32.mrf.mxu0
      %514 = vdwg.mxu0
      %v516 = vsel %vm245, %v349, 0
      %v518 = vsel %vm367, %v346, 0
      %v520 = vsel %vm367, %v347, 0
      %v522 = vsel %vm367, %v348, 0
      %524 = vmatprep.subr.mxu0 0.0
      %525 = vmatpush1.msra.mxu0 0.0
      %526 = vmatprep.subr.mxu0 0.0
      %527 = vmatpush1.msra.mxu0 0.0
      %528 = vmatprep.subr.mxu0 0.0
      %529 = vmatpush1.msra.mxu0 0.0
      %530 = vmatprep.subr.mxu0 0.0
      %531 = vmatpush1.msra.mxu0 0.0
      %532 = vmatprep.subr.mxu0 0.0
      %533 = vmatpush1.msra.mxu0 0.0
      %534 = vmatprep.subr.mxu0 0.0
      %535 = vmatpush1.msra.mxu0 0.0
      %536 = vmatprep.subr.mxu0 0.0
      %537 = vmatpush1.msra.mxu0 0.0
      %538 = vmatprep.subr.mxu0 0.0
      %539 = vmatpush1.msra.mxu0 0.0
      %540 = vmatprep.subr.mxu0 0.0
      %541 = vmatpush1.msra.mxu0 0.0
      %542 = vmatprep.subr.mxu0 0.0
      %543 = vmatpush1.msra.mxu0 0.0
      %544 = vmatprep.subr.mxu0 0.0
      %545 = vmatpush1.msra.mxu0 0.0
      %546 = vmatprep.subr.mxu0 0.0
      %547 = vmatpush1.msra.mxu0 0.0
      %548 = vmatprep.subr.mxu0 0.0
      %549 = vmatpush1.msra.mxu0 0.0
      %550 = vmatprep.subr.mxu0 0.0
      %551 = vmatpush1.msra.mxu0 0.0
      %552 = vmatprep.subr.mxu0 0.0
      %553 = vmatpush1.msra.mxu0 0.0
      %554 = vmatprep.subr.mxu0 %v520
      %555 = vmatpush1.msra.mxu0 %v518
      %556 = vmatprep.subr.mxu0 0.0
      %557 = vmatpush2.msra.mxu0 0.0
      %558 = vmatprep.subr.mxu0 0.0
      %559 = vmatpush2.msra.mxu0 0.0
      %560 = vmatprep.subr.mxu0 0.0
      %561 = vmatpush2.msra.mxu0 0.0
      %562 = vmatprep.subr.mxu0 0.0
      %563 = vmatpush2.msra.mxu0 0.0
      %564 = vmatprep.subr.mxu0 0.0
      %565 = vmatpush2.msra.mxu0 0.0
      %566 = vmatprep.subr.mxu0 0.0
      %567 = vmatpush2.msra.mxu0 0.0
      %568 = vmatprep.subr.mxu0 0.0
      %569 = vmatpush2.msra.mxu0 0.0
      %570 = vmatprep.subr.mxu0 0.0
      %571 = vmatpush2.msra.mxu0 0.0
      %572 = vmatprep.subr.mxu0 0.0
      %573 = vmatpush2.msra.mxu0 0.0
      %574 = vmatprep.subr.mxu0 0.0
      %575 = vmatpush2.msra.mxu0 0.0
      %576 = vmatprep.subr.mxu0 0.0
      %577 = vmatpush2.msra.mxu0 0.0
      %578 = vmatprep.subr.mxu0 0.0
      %579 = vmatpush2.msra.mxu0 0.0
      %580 = vmatprep.subr.mxu0 0.0
      %581 = vmatpush2.msra.mxu0 0.0
      %582 = vmatprep.subr.mxu0 0.0
      %583 = vmatpush2.msra.mxu0 0.0
      %584 = vmatprep.subr.mxu0 0.0
      %585 = vmatpush2.msra.mxu0 0.0
      %586 = vmatprep.subr.mxu0 0.0
      %587 = vmatpush2.msra.mxu0 0.0
      %588 = vmatprep.mubr.f32.mxu0 0.0
      %589 = vmatmul.mubr.f32.gmra.mxu0 %v516
      %v590 = vpop.f32.mrf.mxu0
      %v591 = vadd.f32 %v441, %v590
      %v592 = vpop.f32.mrf.mxu0
      %v593 = vadd.f32 %v443, %v592
      %594 = vdwg.mxu0
      %595 = vmatprep.subr.mxu0 0.0
      %596 = vmatpush1.msra.mxu0 0.0
      %597 = vmatprep.subr.mxu0 0.0
      %598 = vmatpush1.msra.mxu0 0.0
      %599 = vmatprep.subr.mxu0 0.0
      %600 = vmatpush1.msra.mxu0 0.0
      %601 = vmatprep.subr.mxu0 0.0
      %602 = vmatpush1.msra.mxu0 0.0
      %603 = vmatprep.subr.mxu0 0.0
      %604 = vmatpush1.msra.mxu0 0.0
      %605 = vmatprep.subr.mxu0 0.0
      %606 = vmatpush1.msra.mxu0 0.0
      %607 = vmatprep.subr.mxu0 0.0
      %608 = vmatpush1.msra.mxu0 0.0
      %609 = vmatprep.subr.mxu0 0.0
      %610 = vmatpush1.msra.mxu0 0.0
      %611 = vmatprep.subr.mxu0 0.0
      %612 = vmatpush1.msra.mxu0 0.0
      %613 = vmatprep.subr.mxu0 0.0
      %614 = vmatpush1.msra.mxu0 0.0
      %615 = vmatprep.subr.mxu0 0.0
      %616 = vmatpush1.msra.mxu0 0.0
      %617 = vmatprep.subr.mxu0 0.0
      %618 = vmatpush1.msra.mxu0 0.0
      %619 = vmatprep.subr.mxu0 0.0
      %620 = vmatpush1.msra.mxu0 0.0
      %621 = vmatprep.subr.mxu0 0.0
      %622 = vmatpush1.msra.mxu0 0.0
      %623 = vmatprep.subr.mxu0 0.0
      %624 = vmatpush1.msra.mxu0 0.0
      %625 = vmatprep.subr.mxu0 0.0
      %626 = vmatpush1.msra.mxu0 %v522
      %627 = vmatprep.subr.mxu0 0.0
      %628 = vmatpush2.msra.mxu0 0.0
      %629 = vmatprep.subr.mxu0 0.0
      %630 = vmatpush2.msra.mxu0 0.0
      %631 = vmatprep.subr.mxu0 0.0
      %632 = vmatpush2.msra.mxu0 0.0
      %633 = vmatprep.subr.mxu0 0.0
      %634 = vmatpush2.msra.mxu0 0.0
      %635 = vmatprep.subr.mxu0 0.0
      %636 = vmatpush2.msra.mxu0 0.0
      %637 = vmatprep.subr.mxu0 0.0
      %638 = vmatpush2.msra.mxu0 0.0
      %639 = vmatprep.subr.mxu0 0.0
      %640 = vmatpush2.msra.mxu0 0.0
      %641 = vmatprep.subr.mxu0 0.0
      %642 = vmatpush2.msra.mxu0 0.0
      %643 = vmatprep.subr.mxu0 0.0
      %644 = vmatpush2.msra.mxu0 0.0
      %645 = vmatprep.subr.mxu0 0.0
      %646 = vmatpush2.msra.mxu0 0.0
      %647 = vmatprep.subr.mxu0 0.0
      %648 = vmatpush2.msra.mxu0 0.0
      %649 = vmatprep.subr.mxu0 0.0
      %650 = vmatpush2.msra.mxu0 0.0
      %651 = vmatprep.subr.mxu0 0.0
      %652 = vmatpush2.msra.mxu0 0.0
      %653 = vmatprep.subr.mxu0 0.0
      %654 = vmatpush2.msra.mxu0 0.0
      %655 = vmatprep.subr.mxu0 0.0
      %656 = vmatpush2.msra.mxu0 0.0
      %657 = vmatprep.subr.mxu0 0.0
      %658 = vmatpush2.msra.mxu0 0.0
      %659 = vmatprep.mubr.f32.mxu0 0.0
      %660 = vmatmul.mubr.f32.gmra.mxu0 %v516
      %v661 = vpop.f32.mrf.mxu0
      %v662 = vadd.f32 %v512, %v661
      %v663 = vpop.f32.mrf.mxu0
      %664 = vdwg.mxu0
      %s665 = scalar_lea.vmem %s2, 8
      %v666 = vld [vmem:[%s665] sm:$0xf]
      %667 = vrot.lane.b32.xlu0 %v346, 126
      %v668 = vpop.permute.xlu0 %667
      %669 = vrot.lane.b32.xlu0 %v347, 126
      %v670 = vpop.permute.xlu0 %669
      %671 = vrot.lane.b32.xlu0 %v348, 126
      %v672 = vpop.permute.xlu0 %671
      %vm673 = vcmask 1031168
      %v674 = vsel %vm673, %v668, %v670
      %v675 = vsel %vm673, %v670, %v672
      %v677 = vsel %vm245, %v666, 0
      %v679 = vsel %vm367, %v674, 0
      %v681 = vsel %vm367, %v675, 0
      %v683 = vsel %vm367, %v672, 0
      %685 = vmatprep.subr.mxu0 0.0
      %686 = vmatpush1.msra.mxu0 0.0
      %687 = vmatprep.subr.mxu0 0.0
      %688 = vmatpush1.msra.mxu0 0.0
      %689 = vmatprep.subr.mxu0 0.0
      %690 = vmatpush1.msra.mxu0 0.0
      %691 = vmatprep.subr.mxu0 0.0
      %692 = vmatpush1.msra.mxu0 0.0
      %693 = vmatprep.subr.mxu0 0.0
      %694 = vmatpush1.msra.mxu0 0.0
      %695 = vmatprep.subr.mxu0 0.0
      %696 = vmatpush1.msra.mxu0 0.0
      %697 = vmatprep.subr.mxu0 0.0
      %698 = vmatpush1.msra.mxu0 0.0
      %699 = vmatprep.subr.mxu0 0.0
      %700 = vmatpush1.msra.mxu0 0.0
      %701 = vmatprep.subr.mxu0 0.0
      %702 = vmatpush1.msra.mxu0 0.0
      %703 = vmatprep.subr.mxu0 0.0
      %704 = vmatpush1.msra.mxu0 0.0
      %705 = vmatprep.subr.mxu0 0.0
      %706 = vmatpush1.msra.mxu0 0.0
      %707 = vmatprep.subr.mxu0 0.0
      %708 = vmatpush1.msra.mxu0 0.0
      %709 = vmatprep.subr.mxu0 0.0
      %710 = vmatpush1.msra.mxu0 0.0
      %711 = vmatprep.subr.mxu0 0.0
      %712 = vmatpush1.msra.mxu0 0.0
      %713 = vmatprep.subr.mxu0 0.0
      %714 = vmatpush1.msra.mxu0 0.0
      %715 = vmatprep.subr.mxu0 %v681
      %716 = vmatpush1.msra.mxu0 %v679
      %717 = vmatprep.subr.mxu0 0.0
      %718 = vmatpush2.msra.mxu0 0.0
      %719 = vmatprep.subr.mxu0 0.0
      %720 = vmatpush2.msra.mxu0 0.0
      %721 = vmatprep.subr.mxu0 0.0
      %722 = vmatpush2.msra.mxu0 0.0
      %723 = vmatprep.subr.mxu0 0.0
      %724 = vmatpush2.msra.mxu0 0.0
      %725 = vmatprep.subr.mxu0 0.0
      %726 = vmatpush2.msra.mxu0 0.0
      %727 = vmatprep.subr.mxu0 0.0
      %728 = vmatpush2.msra.mxu0 0.0
      %729 = vmatprep.subr.mxu0 0.0
      %730 = vmatpush2.msra.mxu0 0.0
      %731 = vmatprep.subr.mxu0 0.0
      %732 = vmatpush2.msra.mxu0 0.0
      %733 = vmatprep.subr.mxu0 0.0
      %734 = vmatpush2.msra.mxu0 0.0
      %735 = vmatprep.subr.mxu0 0.0
      %736 = vmatpush2.msra.mxu0 0.0
      %737 = vmatprep.subr.mxu0 0.0
      %738 = vmatpush2.msra.mxu0 0.0
      %739 = vmatprep.subr.mxu0 0.0
      %740 = vmatpush2.msra.mxu0 0.0
      %741 = vmatprep.subr.mxu0 0.0
      %742 = vmatpush2.msra.mxu0 0.0
      %743 = vmatprep.subr.mxu0 0.0
      %744 = vmatpush2.msra.mxu0 0.0
      %745 = vmatprep.subr.mxu0 0.0
      %746 = vmatpush2.msra.mxu0 0.0
      %747 = vmatprep.subr.mxu0 0.0
      %748 = vmatpush2.msra.mxu0 0.0
      %749 = vmatprep.mubr.f32.mxu0 0.0
      %750 = vmatmul.mubr.f32.gmra.mxu0 %v677
      %v751 = vpop.f32.mrf.mxu0
      %v752 = vadd.f32 0.0, %v751
      %v753 = vpop.f32.mrf.mxu0
      %v754 = vadd.f32 0.0, %v753
      %755 = vdwg.mxu0
      %756 = vmatprep.subr.mxu0 0.0
      %757 = vmatpush1.msra.mxu0 0.0
      %758 = vmatprep.subr.mxu0 0.0
      %759 = vmatpush1.msra.mxu0 0.0
      %760 = vmatprep.subr.mxu0 0.0
      %761 = vmatpush1.msra.mxu0 0.0
      %762 = vmatprep.subr.mxu0 0.0
      %763 = vmatpush1.msra.mxu0 0.0
      %764 = vmatprep.subr.mxu0 0.0
      %765 = vmatpush1.msra.mxu0 0.0
      %766 = vmatprep.subr.mxu0 0.0
      %767 = vmatpush1.msra.mxu0 0.0
      %768 = vmatprep.subr.mxu0 0.0
      %769 = vmatpush1.msra.mxu0 0.0
      %770 = vmatprep.subr.mxu0 0.0
      %771 = vmatpush1.msra.mxu0 0.0
      %772 = vmatprep.subr.mxu0 0.0
      %773 = vmatpush1.msra.mxu0 0.0
      %774 = vmatprep.subr.mxu0 0.0
      %775 = vmatpush1.msra.mxu0 0.0
      %776 = vmatprep.subr.mxu0 0.0
      %777 = vmatpush1.msra.mxu0 0.0
      %778 = vmatprep.subr.mxu0 0.0
      %779 = vmatpush1.msra.mxu0 0.0
      %780 = vmatprep.subr.mxu0 0.0
      %781 = vmatpush1.msra.mxu0 0.0
      %782 = vmatprep.subr.mxu0 0.0
      %783 = vmatpush1.msra.mxu0 0.0
      %784 = vmatprep.subr.mxu0 0.0
      %785 = vmatpush1.msra.mxu0 0.0
      %786 = vmatprep.subr.mxu0 0.0
      %787 = vmatpush1.msra.mxu0 %v683
      %788 = vmatprep.subr.mxu0 0.0
      %789 = vmatpush2.msra.mxu0 0.0
      %790 = vmatprep.subr.mxu0 0.0
      %791 = vmatpush2.msra.mxu0 0.0
      %792 = vmatprep.subr.mxu0 0.0
      %793 = vmatpush2.msra.mxu0 0.0
      %794 = vmatprep.subr.mxu0 0.0
      %795 = vmatpush2.msra.mxu0 0.0
      %796 = vmatprep.subr.mxu0 0.0
      %797 = vmatpush2.msra.mxu0 0.0
      %798 = vmatprep.subr.mxu0 0.0
      %799 = vmatpush2.msra.mxu0 0.0
      %800 = vmatprep.subr.mxu0 0.0
      %801 = vmatpush2.msra.mxu0 0.0
      %802 = vmatprep.subr.mxu0 0.0
      %803 = vmatpush2.msra.mxu0 0.0
      %804 = vmatprep.subr.mxu0 0.0
      %805 = vmatpush2.msra.mxu0 0.0
      %806 = vmatprep.subr.mxu0 0.0
      %807 = vmatpush2.msra.mxu0 0.0
      %808 = vmatprep.subr.mxu0 0.0
      %809 = vmatpush2.msra.mxu0 0.0
      %810 = vmatprep.subr.mxu0 0.0
      %811 = vmatpush2.msra.mxu0 0.0
      %812 = vmatprep.subr.mxu0 0.0
      %813 = vmatpush2.msra.mxu0 0.0
      %814 = vmatprep.subr.mxu0 0.0
      %815 = vmatpush2.msra.mxu0 0.0
      %816 = vmatprep.subr.mxu0 0.0
      %817 = vmatpush2.msra.mxu0 0.0
      %818 = vmatprep.subr.mxu0 0.0
      %819 = vmatpush2.msra.mxu0 0.0
      %820 = vmatprep.mubr.f32.mxu0 0.0
      %821 = vmatmul.mubr.f32.gmra.mxu0 %v677
      %v822 = vpop.f32.mrf.mxu0
      %v823 = vadd.f32 0.0, %v822
      %v824 = vpop.f32.mrf.mxu0
      %825 = vdwg.mxu0
      %v826 = vadd.f32 %v591, %v752
      %v827 = vadd.f32 %v593, %v754
      %v828 = vadd.f32 %v662, %v823
      %s829 = scalar_lea.vmem %s2, 12
      %v830 = vld [vmem:[%s829] sm:$0xf]
      %831 = vrot.lane.b32.xlu0 %v346, 110
      %v832 = vpop.permute.xlu0 %831
      %833 = vrot.lane.b32.xlu0 %v347, 110
      %v834 = vpop.permute.xlu0 %833
      %835 = vrot.lane.b32.xlu0 %v348, 110
      %v836 = vpop.permute.xlu0 %835
      %vm837 = vcmask 900096
      %v838 = vsel %vm837, %v832, %v834
      %v839 = vsel %vm837, %v834, %v836
      %v841 = vsel %vm245, %v830, 0
      %v843 = vsel %vm367, %v838, 0
      %v845 = vsel %vm367, %v839, 0
      %v847 = vsel %vm367, %v836, 0
      %849 = vmatprep.subr.mxu0 0.0
      %850 = vmatpush1.msra.mxu0 0.0
      %851 = vmatprep.subr.mxu0 0.0
      %852 = vmatpush1.msra.mxu0 0.0
      %853 = vmatprep.subr.mxu0 0.0
      %854 = vmatpush1.msra.mxu0 0.0
      %855 = vmatprep.subr.mxu0 0.0
      %856 = vmatpush1.msra.mxu0 0.0
      %857 = vmatprep.subr.mxu0 0.0
      %858 = vmatpush1.msra.mxu0 0.0
      %859 = vmatprep.subr.mxu0 0.0
      %860 = vmatpush1.msra.mxu0 0.0
      %861 = vmatprep.subr.mxu0 0.0
      %862 = vmatpush1.msra.mxu0 0.0
      %863 = vmatprep.subr.mxu0 0.0
      %864 = vmatpush1.msra.mxu0 0.0
      %865 = vmatprep.subr.mxu0 0.0
      %866 = vmatpush1.msra.mxu0 0.0
      %867 = vmatprep.subr.mxu0 0.0
      %868 = vmatpush1.msra.mxu0 0.0
      %869 = vmatprep.subr.mxu0 0.0
      %870 = vmatpush1.msra.mxu0 0.0
      %871 = vmatprep.subr.mxu0 0.0
      %872 = vmatpush1.msra.mxu0 0.0
      %873 = vmatprep.subr.mxu0 0.0
      %874 = vmatpush1.msra.mxu0 0.0
      %875 = vmatprep.subr.mxu0 0.0
      %876 = vmatpush1.msra.mxu0 0.0
      %877 = vmatprep.subr.mxu0 0.0
      %878 = vmatpush1.msra.mxu0 0.0
      %879 = vmatprep.subr.mxu0 %v845
      %880 = vmatpush1.msra.mxu0 %v843
      %881 = vmatprep.subr.mxu0 0.0
      %882 = vmatpush2.msra.mxu0 0.0
      %883 = vmatprep.subr.mxu0 0.0
      %884 = vmatpush2.msra.mxu0 0.0
      %885 = vmatprep.subr.mxu0 0.0
      %886 = vmatpush2.msra.mxu0 0.0
      %887 = vmatprep.subr.mxu0 0.0
      %888 = vmatpush2.msra.mxu0 0.0
      %889 = vmatprep.subr.mxu0 0.0
      %890 = vmatpush2.msra.mxu0 0.0
      %891 = vmatprep.subr.mxu0 0.0
      %892 = vmatpush2.msra.mxu0 0.0
      %893 = vmatprep.subr.mxu0 0.0
      %894 = vmatpush2.msra.mxu0 0.0
      %895 = vmatprep.subr.mxu0 0.0
      %896 = vmatpush2.msra.mxu0 0.0
      %897 = vmatprep.subr.mxu0 0.0
      %898 = vmatpush2.msra.mxu0 0.0
      %899 = vmatprep.subr.mxu0 0.0
      %900 = vmatpush2.msra.mxu0 0.0
      %901 = vmatprep.subr.mxu0 0.0
      %902 = vmatpush2.msra.mxu0 0.0
      %903 = vmatprep.subr.mxu0 0.0
      %904 = vmatpush2.msra.mxu0 0.0
      %905 = vmatprep.subr.mxu0 0.0
      %906 = vmatpush2.msra.mxu0 0.0
      %907 = vmatprep.subr.mxu0 0.0
      %908 = vmatpush2.msra.mxu0 0.0
      %909 = vmatprep.subr.mxu0 0.0
      %910 = vmatpush2.msra.mxu0 0.0
      %911 = vmatprep.subr.mxu0 0.0
      %912 = vmatpush2.msra.mxu0 0.0
      %913 = vmatprep.mubr.f32.mxu0 0.0
      %914 = vmatmul.mubr.f32.gmra.mxu0 %v841
      %v915 = vpop.f32.mrf.mxu0
      %v916 = vadd.f32 0.0, %v915
      %v917 = vpop.f32.mrf.mxu0
      %v918 = vadd.f32 0.0, %v917
      %919 = vdwg.mxu0
      %920 = vmatprep.subr.mxu0 0.0
      %921 = vmatpush1.msra.mxu0 0.0
      %922 = vmatprep.subr.mxu0 0.0
      %923 = vmatpush1.msra.mxu0 0.0
      %924 = vmatprep.subr.mxu0 0.0
      %925 = vmatpush1.msra.mxu0 0.0
      %926 = vmatprep.subr.mxu0 0.0
      %927 = vmatpush1.msra.mxu0 0.0
      %928 = vmatprep.subr.mxu0 0.0
      %929 = vmatpush1.msra.mxu0 0.0
      %930 = vmatprep.subr.mxu0 0.0
      %931 = vmatpush1.msra.mxu0 0.0
      %932 = vmatprep.subr.mxu0 0.0
      %933 = vmatpush1.msra.mxu0 0.0
      %934 = vmatprep.subr.mxu0 0.0
      %935 = vmatpush1.msra.mxu0 0.0
      %936 = vmatprep.subr.mxu0 0.0
      %937 = vmatpush1.msra.mxu0 0.0
      %938 = vmatprep.subr.mxu0 0.0
      %939 = vmatpush1.msra.mxu0 0.0
      %940 = vmatprep.subr.mxu0 0.0
      %941 = vmatpush1.msra.mxu0 0.0
      %942 = vmatprep.subr.mxu0 0.0
      %943 = vmatpush1.msra.mxu0 0.0
      %944 = vmatprep.subr.mxu0 0.0
      %945 = vmatpush1.msra.mxu0 0.0
      %946 = vmatprep.subr.mxu0 0.0
      %947 = vmatpush1.msra.mxu0 0.0
      %948 = vmatprep.subr.mxu0 0.0
      %949 = vmatpush1.msra.mxu0 0.0
      %950 = vmatprep.subr.mxu0 0.0
      %951 = vmatpush1.msra.mxu0 %v847
      %952 = vmatprep.subr.mxu0 0.0
      %953 = vmatpush2.msra.mxu0 0.0
      %954 = vmatprep.subr.mxu0 0.0
      %955 = vmatpush2.msra.mxu0 0.0
      %956 = vmatprep.subr.mxu0 0.0
      %957 = vmatpush2.msra.mxu0 0.0
      %958 = vmatprep.subr.mxu0 0.0
      %959 = vmatpush2.msra.mxu0 0.0
      %960 = vmatprep.subr.mxu0 0.0
      %961 = vmatpush2.msra.mxu0 0.0
      %962 = vmatprep.subr.mxu0 0.0
      %963 = vmatpush2.msra.mxu0 0.0
      %964 = vmatprep.subr.mxu0 0.0
      %965 = vmatpush2.msra.mxu0 0.0
      %966 = vmatprep.subr.mxu0 0.0
      %967 = vmatpush2.msra.mxu0 0.0
      %968 = vmatprep.subr.mxu0 0.0
      %969 = vmatpush2.msra.mxu0 0.0
      %970 = vmatprep.subr.mxu0 0.0
      %971 = vmatpush2.msra.mxu0 0.0
      %972 = vmatprep.subr.mxu0 0.0
      %973 = vmatpush2.msra.mxu0 0.0
      %974 = vmatprep.subr.mxu0 0.0
      %975 = vmatpush2.msra.mxu0 0.0
      %976 = vmatprep.subr.mxu0 0.0
      %977 = vmatpush2.msra.mxu0 0.0
      %978 = vmatprep.subr.mxu0 0.0
      %979 = vmatpush2.msra.mxu0 0.0
      %980 = vmatprep.subr.mxu0 0.0
      %981 = vmatpush2.msra.mxu0 0.0
      %982 = vmatprep.subr.mxu0 0.0
      %983 = vmatpush2.msra.mxu0 0.0
      %984 = vmatprep.mubr.f32.mxu0 0.0
      %985 = vmatmul.mubr.f32.gmra.mxu0 %v841
      %v986 = vpop.f32.mrf.mxu0
      %v987 = vadd.f32 0.0, %v986
      %v988 = vpop.f32.mrf.mxu0
      %989 = vdwg.mxu0
      %v990 = vadd.f32 %v826, %v916
      %v991 = vadd.f32 %v827, %v918
      %v992 = vadd.f32 %v828, %v987
      %s993 = scalar_lea.vmem %s2, 16
      %v994 = vld [vmem:[%s993] sm:$0xf]
      %995 = vrot.lane.b32.xlu0 %v346, 109
      %v996 = vpop.permute.xlu0 %995
      %997 = vrot.lane.b32.xlu0 %v347, 109
      %v998 = vpop.permute.xlu0 %997
      %999 = vrot.lane.b32.xlu0 %v348, 109
      %v1000 = vpop.permute.xlu0 %999
      %vm1001 = vcmask 891904
      %v1002 = vsel %vm1001, %v996, %v998
      %v1003 = vsel %vm1001, %v998, %v1000
      %v1005 = vsel %vm245, %v994, 0
      %v1007 = vsel %vm367, %v1002, 0
      %v1009 = vsel %vm367, %v1003, 0
      %v1011 = vsel %vm367, %v1000, 0
      %1013 = vmatprep.subr.mxu0 0.0
      %1014 = vmatpush1.msra.mxu0 0.0
      %1015 = vmatprep.subr.mxu0 0.0
      %1016 = vmatpush1.msra.mxu0 0.0
      %1017 = vmatprep.subr.mxu0 0.0
      %1018 = vmatpush1.msra.mxu0 0.0
      %1019 = vmatprep.subr.mxu0 0.0
      %1020 = vmatpush1.msra.mxu0 0.0
      %1021 = vmatprep.subr.mxu0 0.0
      %1022 = vmatpush1.msra.mxu0 0.0
      %1023 = vmatprep.subr.mxu0 0.0
      %1024 = vmatpush1.msra.mxu0 0.0
      %1025 = vmatprep.subr.mxu0 0.0
      %1026 = vmatpush1.msra.mxu0 0.0
      %1027 = vmatprep.subr.mxu0 0.0
      %1028 = vmatpush1.msra.mxu0 0.0
      %1029 = vmatprep.subr.mxu0 0.0
      %1030 = vmatpush1.msra.mxu0 0.0
      %1031 = vmatprep.subr.mxu0 0.0
      %1032 = vmatpush1.msra.mxu0 0.0
      %1033 = vmatprep.subr.mxu0 0.0
      %1034 = vmatpush1.msra.mxu0 0.0
      %1035 = vmatprep.subr.mxu0 0.0
      %1036 = vmatpush1.msra.mxu0 0.0
      %1037 = vmatprep.subr.mxu0 0.0
      %1038 = vmatpush1.msra.mxu0 0.0
      %1039 = vmatprep.subr.mxu0 0.0
      %1040 = vmatpush1.msra.mxu0 0.0
      %1041 = vmatprep.subr.mxu0 0.0
      %1042 = vmatpush1.msra.mxu0 0.0
      %1043 = vmatprep.subr.mxu0 %v1009
      %1044 = vmatpush1.msra.mxu0 %v1007
      %1045 = vmatprep.subr.mxu0 0.0
      %1046 = vmatpush2.msra.mxu0 0.0
      %1047 = vmatprep.subr.mxu0 0.0
      %1048 = vmatpush2.msra.mxu0 0.0
      %1049 = vmatprep.subr.mxu0 0.0
      %1050 = vmatpush2.msra.mxu0 0.0
      %1051 = vmatprep.subr.mxu0 0.0
      %1052 = vmatpush2.msra.mxu0 0.0
      %1053 = vmatprep.subr.mxu0 0.0
      %1054 = vmatpush2.msra.mxu0 0.0
      %1055 = vmatprep.subr.mxu0 0.0
      %1056 = vmatpush2.msra.mxu0 0.0
      %1057 = vmatprep.subr.mxu0 0.0
      %1058 = vmatpush2.msra.mxu0 0.0
      %1059 = vmatprep.subr.mxu0 0.0
      %1060 = vmatpush2.msra.mxu0 0.0
      %1061 = vmatprep.subr.mxu0 0.0
      %1062 = vmatpush2.msra.mxu0 0.0
      %1063 = vmatprep.subr.mxu0 0.0
      %1064 = vmatpush2.msra.mxu0 0.0
      %1065 = vmatprep.subr.mxu0 0.0
      %1066 = vmatpush2.msra.mxu0 0.0
      %1067 = vmatprep.subr.mxu0 0.0
      %1068 = vmatpush2.msra.mxu0 0.0
      %1069 = vmatprep.subr.mxu0 0.0
      %1070 = vmatpush2.msra.mxu0 0.0
      %1071 = vmatprep.subr.mxu0 0.0
      %1072 = vmatpush2.msra.mxu0 0.0
      %1073 = vmatprep.subr.mxu0 0.0
      %1074 = vmatpush2.msra.mxu0 0.0
      %1075 = vmatprep.subr.mxu0 0.0
      %1076 = vmatpush2.msra.mxu0 0.0
      %1077 = vmatprep.mubr.f32.mxu0 0.0
      %1078 = vmatmul.mubr.f32.gmra.mxu0 %v1005
      %v1079 = vpop.f32.mrf.mxu0
      %v1080 = vadd.f32 0.0, %v1079
      %v1081 = vpop.f32.mrf.mxu0
      %v1082 = vadd.f32 0.0, %v1081
      %1083 = vdwg.mxu0
      %1084 = vmatprep.subr.mxu0 0.0
      %1085 = vmatpush1.msra.mxu0 0.0
      %1086 = vmatprep.subr.mxu0 0.0
      %1087 = vmatpush1.msra.mxu0 0.0
      %1088 = vmatprep.subr.mxu0 0.0
      %1089 = vmatpush1.msra.mxu0 0.0
      %1090 = vmatprep.subr.mxu0 0.0
      %1091 = vmatpush1.msra.mxu0 0.0
      %1092 = vmatprep.subr.mxu0 0.0
      %1093 = vmatpush1.msra.mxu0 0.0
      %1094 = vmatprep.subr.mxu0 0.0
      %1095 = vmatpush1.msra.mxu0 0.0
      %1096 = vmatprep.subr.mxu0 0.0
      %1097 = vmatpush1.msra.mxu0 0.0
      %1098 = vmatprep.subr.mxu0 0.0
      %1099 = vmatpush1.msra.mxu0 0.0
      %1100 = vmatprep.subr.mxu0 0.0
      %1101 = vmatpush1.msra.mxu0 0.0
      %1102 = vmatprep.subr.mxu0 0.0
      %1103 = vmatpush1.msra.mxu0 0.0
      %1104 = vmatprep.subr.mxu0 0.0
      %1105 = vmatpush1.msra.mxu0 0.0
      %1106 = vmatprep.subr.mxu0 0.0
      %1107 = vmatpush1.msra.mxu0 0.0
      %1108 = vmatprep.subr.mxu0 0.0
      %1109 = vmatpush1.msra.mxu0 0.0
      %1110 = vmatprep.subr.mxu0 0.0
      %1111 = vmatpush1.msra.mxu0 0.0
      %1112 = vmatprep.subr.mxu0 0.0
      %1113 = vmatpush1.msra.mxu0 0.0
      %1114 = vmatprep.subr.mxu0 0.0
      %1115 = vmatpush1.msra.mxu0 %v1011
      %1116 = vmatprep.subr.mxu0 0.0
      %1117 = vmatpush2.msra.mxu0 0.0
      %1118 = vmatprep.subr.mxu0 0.0
      %1119 = vmatpush2.msra.mxu0 0.0
      %1120 = vmatprep.subr.mxu0 0.0
      %1121 = vmatpush2.msra.mxu0 0.0
      %1122 = vmatprep.subr.mxu0 0.0
      %1123 = vmatpush2.msra.mxu0 0.0
      %1124 = vmatprep.subr.mxu0 0.0
      %1125 = vmatpush2.msra.mxu0 0.0
      %1126 = vmatprep.subr.mxu0 0.0
      %1127 = vmatpush2.msra.mxu0 0.0
      %1128 = vmatprep.subr.mxu0 0.0
      %1129 = vmatpush2.msra.mxu0 0.0
      %1130 = vmatprep.subr.mxu0 0.0
      %1131 = vmatpush2.msra.mxu0 0.0
      %1132 = vmatprep.subr.mxu0 0.0
      %1133 = vmatpush2.msra.mxu0 0.0
      %1134 = vmatprep.subr.mxu0 0.0
      %1135 = vmatpush2.msra.mxu0 0.0
      %1136 = vmatprep.subr.mxu0 0.0
      %1137 = vmatpush2.msra.mxu0 0.0
      %1138 = vmatprep.subr.mxu0 0.0
      %1139 = vmatpush2.msra.mxu0 0.0
      %1140 = vmatprep.subr.mxu0 0.0
      %1141 = vmatpush2.msra.mxu0 0.0
      %1142 = vmatprep.subr.mxu0 0.0
      %1143 = vmatpush2.msra.mxu0 0.0
      %1144 = vmatprep.subr.mxu0 0.0
      %1145 = vmatpush2.msra.mxu0 0.0
      %1146 = vmatprep.subr.mxu0 0.0
      %1147 = vmatpush2.msra.mxu0 0.0
      %1148 = vmatprep.mubr.f32.mxu0 0.0
      %1149 = vmatmul.mubr.f32.gmra.mxu0 %v1005
      %v1150 = vpop.f32.mrf.mxu0
      %v1151 = vadd.f32 0.0, %v1150
      %v1152 = vpop.f32.mrf.mxu0
      %1153 = vdwg.mxu0
      %v1154 = vadd.f32 %v990, %v1080
      %v1155 = vadd.f32 %v991, %v1082
      %v1156 = vadd.f32 %v992, %v1151
      %s1157 = scalar_lea.vmem %s2, 20
      %v1158 = vld [vmem:[%s1157] sm:$0xf]
      %1159 = vrot.lane.b32.xlu0 %v346, 108
      %v1160 = vpop.permute.xlu0 %1159
      %1161 = vrot.lane.b32.xlu0 %v347, 108
      %v1162 = vpop.permute.xlu0 %1161
      %1163 = vrot.lane.b32.xlu0 %v348, 108
      %v1164 = vpop.permute.xlu0 %1163
      %vm1165 = vcmask 883712
      %v1166 = vsel %vm1165, %v1160, %v1162
      %v1167 = vsel %vm1165, %v1162, %v1164
      %v1169 = vsel %vm245, %v1158, 0
      %v1171 = vsel %vm367, %v1166, 0
      %v1173 = vsel %vm367, %v1167, 0
      %v1175 = vsel %vm367, %v1164, 0
      %1177 = vmatprep.subr.mxu0 0.0
      %1178 = vmatpush1.msra.mxu0 0.0
      %1179 = vmatprep.subr.mxu0 0.0
      %1180 = vmatpush1.msra.mxu0 0.0
      %1181 = vmatprep.subr.mxu0 0.0
      %1182 = vmatpush1.msra.mxu0 0.0
      %1183 = vmatprep.subr.mxu0 0.0
      %1184 = vmatpush1.msra.mxu0 0.0
      %1185 = vmatprep.subr.mxu0 0.0
      %1186 = vmatpush1.msra.mxu0 0.0
      %1187 = vmatprep.subr.mxu0 0.0
      %1188 = vmatpush1.msra.mxu0 0.0
      %1189 = vmatprep.subr.mxu0 0.0
      %1190 = vmatpush1.msra.mxu0 0.0
      %1191 = vmatprep.subr.mxu0 0.0
      %1192 = vmatpush1.msra.mxu0 0.0
      %1193 = vmatprep.subr.mxu0 0.0
      %1194 = vmatpush1.msra.mxu0 0.0
      %1195 = vmatprep.subr.mxu0 0.0
      %1196 = vmatpush1.msra.mxu0 0.0
      %1197 = vmatprep.subr.mxu0 0.0
      %1198 = vmatpush1.msra.mxu0 0.0
      %1199 = vmatprep.subr.mxu0 0.0
      %1200 = vmatpush1.msra.mxu0 0.0
      %1201 = vmatprep.subr.mxu0 0.0
      %1202 = vmatpush1.msra.mxu0 0.0
      %1203 = vmatprep.subr.mxu0 0.0
      %1204 = vmatpush1.msra.mxu0 0.0
      %1205 = vmatprep.subr.mxu0 0.0
      %1206 = vmatpush1.msra.mxu0 0.0
      %1207 = vmatprep.subr.mxu0 %v1173
      %1208 = vmatpush1.msra.mxu0 %v1171
      %1209 = vmatprep.subr.mxu0 0.0
      %1210 = vmatpush2.msra.mxu0 0.0
      %1211 = vmatprep.subr.mxu0 0.0
      %1212 = vmatpush2.msra.mxu0 0.0
      %1213 = vmatprep.subr.mxu0 0.0
      %1214 = vmatpush2.msra.mxu0 0.0
      %1215 = vmatprep.subr.mxu0 0.0
      %1216 = vmatpush2.msra.mxu0 0.0
      %1217 = vmatprep.subr.mxu0 0.0
      %1218 = vmatpush2.msra.mxu0 0.0
      %1219 = vmatprep.subr.mxu0 0.0
      %1220 = vmatpush2.msra.mxu0 0.0
      %1221 = vmatprep.subr.mxu0 0.0
      %1222 = vmatpush2.msra.mxu0 0.0
      %1223 = vmatprep.subr.mxu0 0.0
      %1224 = vmatpush2.msra.mxu0 0.0
      %1225 = vmatprep.subr.mxu0 0.0
      %1226 = vmatpush2.msra.mxu0 0.0
      %1227 = vmatprep.subr.mxu0 0.0
      %1228 = vmatpush2.msra.mxu0 0.0
      %1229 = vmatprep.subr.mxu0 0.0
      %1230 = vmatpush2.msra.mxu0 0.0
      %1231 = vmatprep.subr.mxu0 0.0
      %1232 = vmatpush2.msra.mxu0 0.0
      %1233 = vmatprep.subr.mxu0 0.0
      %1234 = vmatpush2.msra.mxu0 0.0
      %1235 = vmatprep.subr.mxu0 0.0
      %1236 = vmatpush2.msra.mxu0 0.0
      %1237 = vmatprep.subr.mxu0 0.0
      %1238 = vmatpush2.msra.mxu0 0.0
      %1239 = vmatprep.subr.mxu0 0.0
      %1240 = vmatpush2.msra.mxu0 0.0
      %1241 = vmatprep.mubr.f32.mxu0 0.0
      %1242 = vmatmul.mubr.f32.gmra.mxu0 %v1169
      %v1243 = vpop.f32.mrf.mxu0
      %v1244 = vadd.f32 0.0, %v1243
      %v1245 = vpop.f32.mrf.mxu0
      %v1246 = vadd.f32 0.0, %v1245
      %1247 = vdwg.mxu0
      %1248 = vmatprep.subr.mxu0 0.0
      %1249 = vmatpush1.msra.mxu0 0.0
      %1250 = vmatprep.subr.mxu0 0.0
      %1251 = vmatpush1.msra.mxu0 0.0
      %1252 = vmatprep.subr.mxu0 0.0
      %1253 = vmatpush1.msra.mxu0 0.0
      %1254 = vmatprep.subr.mxu0 0.0
      %1255 = vmatpush1.msra.mxu0 0.0
      %1256 = vmatprep.subr.mxu0 0.0
      %1257 = vmatpush1.msra.mxu0 0.0
      %1258 = vmatprep.subr.mxu0 0.0
      %1259 = vmatpush1.msra.mxu0 0.0
      %1260 = vmatprep.subr.mxu0 0.0
      %1261 = vmatpush1.msra.mxu0 0.0
      %1262 = vmatprep.subr.mxu0 0.0
      %1263 = vmatpush1.msra.mxu0 0.0
      %1264 = vmatprep.subr.mxu0 0.0
      %1265 = vmatpush1.msra.mxu0 0.0
      %1266 = vmatprep.subr.mxu0 0.0
      %1267 = vmatpush1.msra.mxu0 0.0
      %1268 = vmatprep.subr.mxu0 0.0
      %1269 = vmatpush1.msra.mxu0 0.0
      %1270 = vmatprep.subr.mxu0 0.0
      %1271 = vmatpush1.msra.mxu0 0.0
      %1272 = vmatprep.subr.mxu0 0.0
      %1273 = vmatpush1.msra.mxu0 0.0
      %1274 = vmatprep.subr.mxu0 0.0
      %1275 = vmatpush1.msra.mxu0 0.0
      %1276 = vmatprep.subr.mxu0 0.0
      %1277 = vmatpush1.msra.mxu0 0.0
      %1278 = vmatprep.subr.mxu0 0.0
      %1279 = vmatpush1.msra.mxu0 %v1175
      %1280 = vmatprep.subr.mxu0 0.0
      %1281 = vmatpush2.msra.mxu0 0.0
      %1282 = vmatprep.subr.mxu0 0.0
      %1283 = vmatpush2.msra.mxu0 0.0
      %1284 = vmatprep.subr.mxu0 0.0
      %1285 = vmatpush2.msra.mxu0 0.0
      %1286 = vmatprep.subr.mxu0 0.0
      %1287 = vmatpush2.msra.mxu0 0.0
      %1288 = vmatprep.subr.mxu0 0.0
      %1289 = vmatpush2.msra.mxu0 0.0
      %1290 = vmatprep.subr.mxu0 0.0
      %1291 = vmatpush2.msra.mxu0 0.0
      %1292 = vmatprep.subr.mxu0 0.0
      %1293 = vmatpush2.msra.mxu0 0.0
      %1294 = vmatprep.subr.mxu0 0.0
      %1295 = vmatpush2.msra.mxu0 0.0
      %1296 = vmatprep.subr.mxu0 0.0
      %1297 = vmatpush2.msra.mxu0 0.0
      %1298 = vmatprep.subr.mxu0 0.0
      %1299 = vmatpush2.msra.mxu0 0.0
      %1300 = vmatprep.subr.mxu0 0.0
      %1301 = vmatpush2.msra.mxu0 0.0
      %1302 = vmatprep.subr.mxu0 0.0
      %1303 = vmatpush2.msra.mxu0 0.0
      %1304 = vmatprep.subr.mxu0 0.0
      %1305 = vmatpush2.msra.mxu0 0.0
      %1306 = vmatprep.subr.mxu0 0.0
      %1307 = vmatpush2.msra.mxu0 0.0
      %1308 = vmatprep.subr.mxu0 0.0
      %1309 = vmatpush2.msra.mxu0 0.0
      %1310 = vmatprep.subr.mxu0 0.0
      %1311 = vmatpush2.msra.mxu0 0.0
      %1312 = vmatprep.mubr.f32.mxu0 0.0
      %1313 = vmatmul.mubr.f32.gmra.mxu0 %v1169
      %v1314 = vpop.f32.mrf.mxu0
      %v1315 = vadd.f32 0.0, %v1314
      %v1316 = vpop.f32.mrf.mxu0
      %1317 = vdwg.mxu0
      %v1318 = vadd.f32 %v1154, %v1244
      %v1319 = vadd.f32 %v1155, %v1246
      %v1320 = vadd.f32 %v1156, %v1315
      %s1321 = scalar_lea.vmem %s2, 24
      %v1322 = vld [vmem:[%s1321] sm:$0xf]
      %1323 = vrot.lane.b32.xlu0 %v346, 92
      %v1324 = vpop.permute.xlu0 %1323
      %1325 = vrot.lane.b32.xlu0 %v347, 92
      %v1326 = vpop.permute.xlu0 %1325
      %1327 = vrot.lane.b32.xlu0 %v348, 92
      %v1328 = vpop.permute.xlu0 %1327
      %vm1329 = vcmask 752640
      %v1330 = vsel %vm1329, %v1324, %v1326
      %v1331 = vsel %vm1329, %v1326, %v1328
      %v1333 = vsel %vm245, %v1322, 0
      %v1335 = vsel %vm367, %v1330, 0
      %v1337 = vsel %vm367, %v1331, 0
      %v1339 = vsel %vm367, %v1328, 0
      %1341 = vmatprep.subr.mxu0 0.0
      %1342 = vmatpush1.msra.mxu0 0.0
      %1343 = vmatprep.subr.mxu0 0.0
      %1344 = vmatpush1.msra.mxu0 0.0
      %1345 = vmatprep.subr.mxu0 0.0
      %1346 = vmatpush1.msra.mxu0 0.0
      %1347 = vmatprep.subr.mxu0 0.0
      %1348 = vmatpush1.msra.mxu0 0.0
      %1349 = vmatprep.subr.mxu0 0.0
      %1350 = vmatpush1.msra.mxu0 0.0
      %1351 = vmatprep.subr.mxu0 0.0
      %1352 = vmatpush1.msra.mxu0 0.0
      %1353 = vmatprep.subr.mxu0 0.0
      %1354 = vmatpush1.msra.mxu0 0.0
      %1355 = vmatprep.subr.mxu0 0.0
      %1356 = vmatpush1.msra.mxu0 0.0
      %1357 = vmatprep.subr.mxu0 0.0
      %1358 = vmatpush1.msra.mxu0 0.0
      %1359 = vmatprep.subr.mxu0 0.0
      %1360 = vmatpush1.msra.mxu0 0.0
      %1361 = vmatprep.subr.mxu0 0.0
      %1362 = vmatpush1.msra.mxu0 0.0
      %1363 = vmatprep.subr.mxu0 0.0
      %1364 = vmatpush1.msra.mxu0 0.0
      %1365 = vmatprep.subr.mxu0 0.0
      %1366 = vmatpush1.msra.mxu0 0.0
      %1367 = vmatprep.subr.mxu0 0.0
      %1368 = vmatpush1.msra.mxu0 0.0
      %1369 = vmatprep.subr.mxu0 0.0
      %1370 = vmatpush1.msra.mxu0 0.0
      %1371 = vmatprep.subr.mxu0 %v1337
      %1372 = vmatpush1.msra.mxu0 %v1335
      %1373 = vmatprep.subr.mxu0 0.0
      %1374 = vmatpush2.msra.mxu0 0.0
      %1375 = vmatprep.subr.mxu0 0.0
      %1376 = vmatpush2.msra.mxu0 0.0
      %1377 = vmatprep.subr.mxu0 0.0
      %1378 = vmatpush2.msra.mxu0 0.0
      %1379 = vmatprep.subr.mxu0 0.0
      %1380 = vmatpush2.msra.mxu0 0.0
      %1381 = vmatprep.subr.mxu0 0.0
      %1382 = vmatpush2.msra.mxu0 0.0
      %1383 = vmatprep.subr.mxu0 0.0
      %1384 = vmatpush2.msra.mxu0 0.0
      %1385 = vmatprep.subr.mxu0 0.0
      %1386 = vmatpush2.msra.mxu0 0.0
      %1387 = vmatprep.subr.mxu0 0.0
      %1388 = vmatpush2.msra.mxu0 0.0
      %1389 = vmatprep.subr.mxu0 0.0
      %1390 = vmatpush2.msra.mxu0 0.0
      %1391 = vmatprep.subr.mxu0 0.0
      %1392 = vmatpush2.msra.mxu0 0.0
      %1393 = vmatprep.subr.mxu0 0.0
      %1394 = vmatpush2.msra.mxu0 0.0
      %1395 = vmatprep.subr.mxu0 0.0
      %1396 = vmatpush2.msra.mxu0 0.0
      %1397 = vmatprep.subr.mxu0 0.0
      %1398 = vmatpush2.msra.mxu0 0.0
      %1399 = vmatprep.subr.mxu0 0.0
      %1400 = vmatpush2.msra.mxu0 0.0
      %1401 = vmatprep.subr.mxu0 0.0
      %1402 = vmatpush2.msra.mxu0 0.0
      %1403 = vmatprep.subr.mxu0 0.0
      %1404 = vmatpush2.msra.mxu0 0.0
      %1405 = vmatprep.mubr.f32.mxu0 0.0
      %1406 = vmatmul.mubr.f32.gmra.mxu0 %v1333
      %v1407 = vpop.f32.mrf.mxu0
      %v1408 = vadd.f32 0.0, %v1407
      %v1409 = vpop.f32.mrf.mxu0
      %v1410 = vadd.f32 0.0, %v1409
      %1411 = vdwg.mxu0
      %1412 = vmatprep.subr.mxu0 0.0
      %1413 = vmatpush1.msra.mxu0 0.0
      %1414 = vmatprep.subr.mxu0 0.0
      %1415 = vmatpush1.msra.mxu0 0.0
      %1416 = vmatprep.subr.mxu0 0.0
      %1417 = vmatpush1.msra.mxu0 0.0
      %1418 = vmatprep.subr.mxu0 0.0
      %1419 = vmatpush1.msra.mxu0 0.0
      %1420 = vmatprep.subr.mxu0 0.0
      %1421 = vmatpush1.msra.mxu0 0.0
      %1422 = vmatprep.subr.mxu0 0.0
      %1423 = vmatpush1.msra.mxu0 0.0
      %1424 = vmatprep.subr.mxu0 0.0
      %1425 = vmatpush1.msra.mxu0 0.0
      %1426 = vmatprep.subr.mxu0 0.0
      %1427 = vmatpush1.msra.mxu0 0.0
      %1428 = vmatprep.subr.mxu0 0.0
      %1429 = vmatpush1.msra.mxu0 0.0
      %1430 = vmatprep.subr.mxu0 0.0
      %1431 = vmatpush1.msra.mxu0 0.0
      %1432 = vmatprep.subr.mxu0 0.0
      %1433 = vmatpush1.msra.mxu0 0.0
      %1434 = vmatprep.subr.mxu0 0.0
      %1435 = vmatpush1.msra.mxu0 0.0
      %1436 = vmatprep.subr.mxu0 0.0
      %1437 = vmatpush1.msra.mxu0 0.0
      %1438 = vmatprep.subr.mxu0 0.0
      %1439 = vmatpush1.msra.mxu0 0.0
      %1440 = vmatprep.subr.mxu0 0.0
      %1441 = vmatpush1.msra.mxu0 0.0
      %1442 = vmatprep.subr.mxu0 0.0
      %1443 = vmatpush1.msra.mxu0 %v1339
      %1444 = vmatprep.subr.mxu0 0.0
      %1445 = vmatpush2.msra.mxu0 0.0
      %1446 = vmatprep.subr.mxu0 0.0
      %1447 = vmatpush2.msra.mxu0 0.0
      %1448 = vmatprep.subr.mxu0 0.0
      %1449 = vmatpush2.msra.mxu0 0.0
      %1450 = vmatprep.subr.mxu0 0.0
      %1451 = vmatpush2.msra.mxu0 0.0
      %1452 = vmatprep.subr.mxu0 0.0
      %1453 = vmatpush2.msra.mxu0 0.0
      %1454 = vmatprep.subr.mxu0 0.0
      %1455 = vmatpush2.msra.mxu0 0.0
      %1456 = vmatprep.subr.mxu0 0.0
      %1457 = vmatpush2.msra.mxu0 0.0
      %1458 = vmatprep.subr.mxu0 0.0
      %1459 = vmatpush2.msra.mxu0 0.0
      %1460 = vmatprep.subr.mxu0 0.0
      %1461 = vmatpush2.msra.mxu0 0.0
      %1462 = vmatprep.subr.mxu0 0.0
      %1463 = vmatpush2.msra.mxu0 0.0
      %1464 = vmatprep.subr.mxu0 0.0
      %1465 = vmatpush2.msra.mxu0 0.0
      %1466 = vmatprep.subr.mxu0 0.0
      %1467 = vmatpush2.msra.mxu0 0.0
      %1468 = vmatprep.subr.mxu0 0.0
      %1469 = vmatpush2.msra.mxu0 0.0
      %1470 = vmatprep.subr.mxu0 0.0
      %1471 = vmatpush2.msra.mxu0 0.0
      %1472 = vmatprep.subr.mxu0 0.0
      %1473 = vmatpush2.msra.mxu0 0.0
      %1474 = vmatprep.subr.mxu0 0.0
      %1475 = vmatpush2.msra.mxu0 0.0
      %1476 = vmatprep.mubr.f32.mxu0 0.0
      %1477 = vmatmul.mubr.f32.gmra.mxu0 %v1333
      %v1478 = vpop.f32.mrf.mxu0
      %v1479 = vadd.f32 0.0, %v1478
      %v1480 = vpop.f32.mrf.mxu0
      %1481 = vdwg.mxu0
      %v1482 = vadd.f32 %v1318, %v1408
      %v1483 = vadd.f32 %v1319, %v1410
      %v1484 = vadd.f32 %v1320, %v1479
      %s1485 = scalar_lea.vmem %s2, 28
      %v1486 = vld [vmem:[%s1485] sm:$0xf]
      %1487 = vrot.lane.b32.xlu0 %v346, 91
      %v1488 = vpop.permute.xlu0 %1487
      %1489 = vrot.lane.b32.xlu0 %v347, 91
      %v1490 = vpop.permute.xlu0 %1489
      %1491 = vrot.lane.b32.xlu0 %v348, 91
      %v1492 = vpop.permute.xlu0 %1491
      %vm1493 = vcmask 744448
      %v1494 = vsel %vm1493, %v1488, %v1490
      %v1495 = vsel %vm1493, %v1490, %v1492
      %v1497 = vsel %vm245, %v1486, 0
      %v1499 = vsel %vm367, %v1494, 0
      %v1501 = vsel %vm367, %v1495, 0
      %v1503 = vsel %vm367, %v1492, 0
      %1505 = vmatprep.subr.mxu0 0.0
      %1506 = vmatpush1.msra.mxu0 0.0
      %1507 = vmatprep.subr.mxu0 0.0
      %1508 = vmatpush1.msra.mxu0 0.0
      %1509 = vmatprep.subr.mxu0 0.0
      %1510 = vmatpush1.msra.mxu0 0.0
      %1511 = vmatprep.subr.mxu0 0.0
      %1512 = vmatpush1.msra.mxu0 0.0
      %1513 = vmatprep.subr.mxu0 0.0
      %1514 = vmatpush1.msra.mxu0 0.0
      %1515 = vmatprep.subr.mxu0 0.0
      %1516 = vmatpush1.msra.mxu0 0.0
      %1517 = vmatprep.subr.mxu0 0.0
      %1518 = vmatpush1.msra.mxu0 0.0
      %1519 = vmatprep.subr.mxu0 0.0
      %1520 = vmatpush1.msra.mxu0 0.0
      %1521 = vmatprep.subr.mxu0 0.0
      %1522 = vmatpush1.msra.mxu0 0.0
      %1523 = vmatprep.subr.mxu0 0.0
      %1524 = vmatpush1.msra.mxu0 0.0
      %1525 = vmatprep.subr.mxu0 0.0
      %1526 = vmatpush1.msra.mxu0 0.0
      %1527 = vmatprep.subr.mxu0 0.0
      %1528 = vmatpush1.msra.mxu0 0.0
      %1529 = vmatprep.subr.mxu0 0.0
      %1530 = vmatpush1.msra.mxu0 0.0
      %1531 = vmatprep.subr.mxu0 0.0
      %1532 = vmatpush1.msra.mxu0 0.0
      %1533 = vmatprep.subr.mxu0 0.0
      %1534 = vmatpush1.msra.mxu0 0.0
      %1535 = vmatprep.subr.mxu0 %v1501
      %1536 = vmatpush1.msra.mxu0 %v1499
      %1537 = vmatprep.subr.mxu0 0.0
      %1538 = vmatpush2.msra.mxu0 0.0
      %1539 = vmatprep.subr.mxu0 0.0
      %1540 = vmatpush2.msra.mxu0 0.0
      %1541 = vmatprep.subr.mxu0 0.0
      %1542 = vmatpush2.msra.mxu0 0.0
      %1543 = vmatprep.subr.mxu0 0.0
      %1544 = vmatpush2.msra.mxu0 0.0
      %1545 = vmatprep.subr.mxu0 0.0
      %1546 = vmatpush2.msra.mxu0 0.0
      %1547 = vmatprep.subr.mxu0 0.0
      %1548 = vmatpush2.msra.mxu0 0.0
      %1549 = vmatprep.subr.mxu0 0.0
      %1550 = vmatpush2.msra.mxu0 0.0
      %1551 = vmatprep.subr.mxu0 0.0
      %1552 = vmatpush2.msra.mxu0 0.0
      %1553 = vmatprep.subr.mxu0 0.0
      %1554 = vmatpush2.msra.mxu0 0.0
      %1555 = vmatprep.subr.mxu0 0.0
      %1556 = vmatpush2.msra.mxu0 0.0
      %1557 = vmatprep.subr.mxu0 0.0
      %1558 = vmatpush2.msra.mxu0 0.0
      %1559 = vmatprep.subr.mxu0 0.0
      %1560 = vmatpush2.msra.mxu0 0.0
      %1561 = vmatprep.subr.mxu0 0.0
      %1562 = vmatpush2.msra.mxu0 0.0
      %1563 = vmatprep.subr.mxu0 0.0
      %1564 = vmatpush2.msra.mxu0 0.0
      %1565 = vmatprep.subr.mxu0 0.0
      %1566 = vmatpush2.msra.mxu0 0.0
      %1567 = vmatprep.subr.mxu0 0.0
      %1568 = vmatpush2.msra.mxu0 0.0
      %1569 = vmatprep.mubr.f32.mxu0 0.0
      %1570 = vmatmul.mubr.f32.gmra.mxu0 %v1497
      %v1571 = vpop.f32.mrf.mxu0
      %v1572 = vadd.f32 0.0, %v1571
      %v1573 = vpop.f32.mrf.mxu0
      %v1574 = vadd.f32 0.0, %v1573
      %1575 = vdwg.mxu0
      %1576 = vmatprep.subr.mxu0 0.0
      %1577 = vmatpush1.msra.mxu0 0.0
      %1578 = vmatprep.subr.mxu0 0.0
      %1579 = vmatpush1.msra.mxu0 0.0
      %1580 = vmatprep.subr.mxu0 0.0
      %1581 = vmatpush1.msra.mxu0 0.0
      %1582 = vmatprep.subr.mxu0 0.0
      %1583 = vmatpush1.msra.mxu0 0.0
      %1584 = vmatprep.subr.mxu0 0.0
      %1585 = vmatpush1.msra.mxu0 0.0
      %1586 = vmatprep.subr.mxu0 0.0
      %1587 = vmatpush1.msra.mxu0 0.0
      %1588 = vmatprep.subr.mxu0 0.0
      %1589 = vmatpush1.msra.mxu0 0.0
      %1590 = vmatprep.subr.mxu0 0.0
      %1591 = vmatpush1.msra.mxu0 0.0
      %1592 = vmatprep.subr.mxu0 0.0
      %1593 = vmatpush1.msra.mxu0 0.0
      %1594 = vmatprep.subr.mxu0 0.0
      %1595 = vmatpush1.msra.mxu0 0.0
      %1596 = vmatprep.subr.mxu0 0.0
      %1597 = vmatpush1.msra.mxu0 0.0
      %1598 = vmatprep.subr.mxu0 0.0
      %1599 = vmatpush1.msra.mxu0 0.0
      %1600 = vmatprep.subr.mxu0 0.0
      %1601 = vmatpush1.msra.mxu0 0.0
      %1602 = vmatprep.subr.mxu0 0.0
      %1603 = vmatpush1.msra.mxu0 0.0
      %1604 = vmatprep.subr.mxu0 0.0
      %1605 = vmatpush1.msra.mxu0 0.0
      %1606 = vmatprep.subr.mxu0 0.0
      %1607 = vmatpush1.msra.mxu0 %v1503
      %1608 = vmatprep.subr.mxu0 0.0
      %1609 = vmatpush2.msra.mxu0 0.0
      %1610 = vmatprep.subr.mxu0 0.0
      %1611 = vmatpush2.msra.mxu0 0.0
      %1612 = vmatprep.subr.mxu0 0.0
      %1613 = vmatpush2.msra.mxu0 0.0
      %1614 = vmatprep.subr.mxu0 0.0
      %1615 = vmatpush2.msra.mxu0 0.0
      %1616 = vmatprep.subr.mxu0 0.0
      %1617 = vmatpush2.msra.mxu0 0.0
      %1618 = vmatprep.subr.mxu0 0.0
      %1619 = vmatpush2.msra.mxu0 0.0
      %1620 = vmatprep.subr.mxu0 0.0
      %1621 = vmatpush2.msra.mxu0 0.0
      %1622 = vmatprep.subr.mxu0 0.0
      %1623 = vmatpush2.msra.mxu0 0.0
      %1624 = vmatprep.subr.mxu0 0.0
      %1625 = vmatpush2.msra.mxu0 0.0
      %1626 = vmatprep.subr.mxu0 0.0
      %1627 = vmatpush2.msra.mxu0 0.0
      %1628 = vmatprep.subr.mxu0 0.0
      %1629 = vmatpush2.msra.mxu0 0.0
      %1630 = vmatprep.subr.mxu0 0.0
      %1631 = vmatpush2.msra.mxu0 0.0
      %1632 = vmatprep.subr.mxu0 0.0
      %1633 = vmatpush2.msra.mxu0 0.0
      %1634 = vmatprep.subr.mxu0 0.0
      %1635 = vmatpush2.msra.mxu0 0.0
      %1636 = vmatprep.subr.mxu0 0.0
      %1637 = vmatpush2.msra.mxu0 0.0
      %1638 = vmatprep.subr.mxu0 0.0
      %1639 = vmatpush2.msra.mxu0 0.0
      %1640 = vmatprep.mubr.f32.mxu0 0.0
      %1641 = vmatmul.mubr.f32.gmra.mxu0 %v1497
      %v1642 = vpop.f32.mrf.mxu0
      %v1643 = vadd.f32 0.0, %v1642
      %v1644 = vpop.f32.mrf.mxu0
      %1645 = vdwg.mxu0
      %v1646 = vadd.f32 %v1482, %v1572
      %v1647 = vadd.f32 %v1483, %v1574
      %v1648 = vadd.f32 %v1484, %v1643
      %s1649 = scalar_lea.vmem %s2, 32
      %v1650 = vld [vmem:[%s1649] sm:$0xf]
      %1651 = vrot.lane.b32.xlu0 %v346, 90
      %v1652 = vpop.permute.xlu0 %1651
      %1653 = vrot.lane.b32.xlu0 %v347, 90
      %v1654 = vpop.permute.xlu0 %1653
      %1655 = vrot.lane.b32.xlu0 %v348, 90
      %v1656 = vpop.permute.xlu0 %1655
      %vm1657 = vcmask 736256
      %v1658 = vsel %vm1657, %v1652, %v1654
      %v1659 = vsel %vm1657, %v1654, %v1656
      %v1661 = vsel %vm245, %v1650, 0
      %v1663 = vsel %vm367, %v1658, 0
      %v1665 = vsel %vm367, %v1659, 0
      %v1667 = vsel %vm367, %v1656, 0
      %1669 = vmatprep.subr.mxu0 0.0
      %1670 = vmatpush1.msra.mxu0 0.0
      %1671 = vmatprep.subr.mxu0 0.0
      %1672 = vmatpush1.msra.mxu0 0.0
      %1673 = vmatprep.subr.mxu0 0.0
      %1674 = vmatpush1.msra.mxu0 0.0
      %1675 = vmatprep.subr.mxu0 0.0
      %1676 = vmatpush1.msra.mxu0 0.0
      %1677 = vmatprep.subr.mxu0 0.0
      %1678 = vmatpush1.msra.mxu0 0.0
      %1679 = vmatprep.subr.mxu0 0.0
      %1680 = vmatpush1.msra.mxu0 0.0
      %1681 = vmatprep.subr.mxu0 0.0
      %1682 = vmatpush1.msra.mxu0 0.0
      %1683 = vmatprep.subr.mxu0 0.0
      %1684 = vmatpush1.msra.mxu0 0.0
      %1685 = vmatprep.subr.mxu0 0.0
      %1686 = vmatpush1.msra.mxu0 0.0
      %1687 = vmatprep.subr.mxu0 0.0
      %1688 = vmatpush1.msra.mxu0 0.0
      %1689 = vmatprep.subr.mxu0 0.0
      %1690 = vmatpush1.msra.mxu0 0.0
      %1691 = vmatprep.subr.mxu0 0.0
      %1692 = vmatpush1.msra.mxu0 0.0
      %1693 = vmatprep.subr.mxu0 0.0
      %1694 = vmatpush1.msra.mxu0 0.0
      %1695 = vmatprep.subr.mxu0 0.0
      %1696 = vmatpush1.msra.mxu0 0.0
      %1697 = vmatprep.subr.mxu0 0.0
      %1698 = vmatpush1.msra.mxu0 0.0
      %1699 = vmatprep.subr.mxu0 %v1665
      %1700 = vmatpush1.msra.mxu0 %v1663
      %1701 = vmatprep.subr.mxu0 0.0
      %1702 = vmatpush2.msra.mxu0 0.0
      %1703 = vmatprep.subr.mxu0 0.0
      %1704 = vmatpush2.msra.mxu0 0.0
      %1705 = vmatprep.subr.mxu0 0.0
      %1706 = vmatpush2.msra.mxu0 0.0
      %1707 = vmatprep.subr.mxu0 0.0
      %1708 = vmatpush2.msra.mxu0 0.0
      %1709 = vmatprep.subr.mxu0 0.0
      %1710 = vmatpush2.msra.mxu0 0.0
      %1711 = vmatprep.subr.mxu0 0.0
      %1712 = vmatpush2.msra.mxu0 0.0
      %1713 = vmatprep.subr.mxu0 0.0
      %1714 = vmatpush2.msra.mxu0 0.0
      %1715 = vmatprep.subr.mxu0 0.0
      %1716 = vmatpush2.msra.mxu0 0.0
      %1717 = vmatprep.subr.mxu0 0.0
      %1718 = vmatpush2.msra.mxu0 0.0
      %1719 = vmatprep.subr.mxu0 0.0
      %1720 = vmatpush2.msra.mxu0 0.0
      %1721 = vmatprep.subr.mxu0 0.0
      %1722 = vmatpush2.msra.mxu0 0.0
      %1723 = vmatprep.subr.mxu0 0.0
      %1724 = vmatpush2.msra.mxu0 0.0
      %1725 = vmatprep.subr.mxu0 0.0
      %1726 = vmatpush2.msra.mxu0 0.0
      %1727 = vmatprep.subr.mxu0 0.0
      %1728 = vmatpush2.msra.mxu0 0.0
      %1729 = vmatprep.subr.mxu0 0.0
      %1730 = vmatpush2.msra.mxu0 0.0
      %1731 = vmatprep.subr.mxu0 0.0
      %1732 = vmatpush2.msra.mxu0 0.0
      %1733 = vmatprep.mubr.f32.mxu0 0.0
      %1734 = vmatmul.mubr.f32.gmra.mxu0 %v1661
      %v1735 = vpop.f32.mrf.mxu0
      %v1736 = vadd.f32 0.0, %v1735
      %v1737 = vpop.f32.mrf.mxu0
      %v1738 = vadd.f32 0.0, %v1737
      %1739 = vdwg.mxu0
      %1740 = vmatprep.subr.mxu0 0.0
      %1741 = vmatpush1.msra.mxu0 0.0
      %1742 = vmatprep.subr.mxu0 0.0
      %1743 = vmatpush1.msra.mxu0 0.0
      %1744 = vmatprep.subr.mxu0 0.0
      %1745 = vmatpush1.msra.mxu0 0.0
      %1746 = vmatprep.subr.mxu0 0.0
      %1747 = vmatpush1.msra.mxu0 0.0
      %1748 = vmatprep.subr.mxu0 0.0
      %1749 = vmatpush1.msra.mxu0 0.0
      %1750 = vmatprep.subr.mxu0 0.0
      %1751 = vmatpush1.msra.mxu0 0.0
      %1752 = vmatprep.subr.mxu0 0.0
      %1753 = vmatpush1.msra.mxu0 0.0
      %1754 = vmatprep.subr.mxu0 0.0
      %1755 = vmatpush1.msra.mxu0 0.0
      %1756 = vmatprep.subr.mxu0 0.0
      %1757 = vmatpush1.msra.mxu0 0.0
      %1758 = vmatprep.subr.mxu0 0.0
      %1759 = vmatpush1.msra.mxu0 0.0
      %1760 = vmatprep.subr.mxu0 0.0
      %1761 = vmatpush1.msra.mxu0 0.0
      %1762 = vmatprep.subr.mxu0 0.0
      %1763 = vmatpush1.msra.mxu0 0.0
      %1764 = vmatprep.subr.mxu0 0.0
      %1765 = vmatpush1.msra.mxu0 0.0
      %1766 = vmatprep.subr.mxu0 0.0
      %1767 = vmatpush1.msra.mxu0 0.0
      %1768 = vmatprep.subr.mxu0 0.0
      %1769 = vmatpush1.msra.mxu0 0.0
      %1770 = vmatprep.subr.mxu0 0.0
      %1771 = vmatpush1.msra.mxu0 %v1667
      %1772 = vmatprep.subr.mxu0 0.0
      %1773 = vmatpush2.msra.mxu0 0.0
      %1774 = vmatprep.subr.mxu0 0.0
      %1775 = vmatpush2.msra.mxu0 0.0
      %1776 = vmatprep.subr.mxu0 0.0
      %1777 = vmatpush2.msra.mxu0 0.0
      %1778 = vmatprep.subr.mxu0 0.0
      %1779 = vmatpush2.msra.mxu0 0.0
      %1780 = vmatprep.subr.mxu0 0.0
      %1781 = vmatpush2.msra.mxu0 0.0
      %1782 = vmatprep.subr.mxu0 0.0
      %1783 = vmatpush2.msra.mxu0 0.0
      %1784 = vmatprep.subr.mxu0 0.0
      %1785 = vmatpush2.msra.mxu0 0.0
      %1786 = vmatprep.subr.mxu0 0.0
      %1787 = vmatpush2.msra.mxu0 0.0
      %1788 = vmatprep.subr.mxu0 0.0
      %1789 = vmatpush2.msra.mxu0 0.0
      %1790 = vmatprep.subr.mxu0 0.0
      %1791 = vmatpush2.msra.mxu0 0.0
      %1792 = vmatprep.subr.mxu0 0.0
      %1793 = vmatpush2.msra.mxu0 0.0
      %1794 = vmatprep.subr.mxu0 0.0
      %1795 = vmatpush2.msra.mxu0 0.0
      %1796 = vmatprep.subr.mxu0 0.0
      %1797 = vmatpush2.msra.mxu0 0.0
      %1798 = vmatprep.subr.mxu0 0.0
      %1799 = vmatpush2.msra.mxu0 0.0
      %1800 = vmatprep.subr.mxu0 0.0
      %1801 = vmatpush2.msra.mxu0 0.0
      %1802 = vmatprep.subr.mxu0 0.0
      %1803 = vmatpush2.msra.mxu0 0.0
      %1804 = vmatprep.mubr.f32.mxu0 0.0
      %1805 = vmatmul.mubr.f32.gmra.mxu0 %v1661
      %v1806 = vpop.f32.mrf.mxu0
      %v1807 = vadd.f32 0.0, %v1806
      %v1808 = vpop.f32.mrf.mxu0
      %1809 = vdwg.mxu0
      %v1810 = vadd.f32 %v1646, %v1736
      %v1811 = vadd.f32 %v1647, %v1738
      %v1812 = vadd.f32 %v1648, %v1807
      %vm1813 = vcmp.ge.f32.partialorder %v1810, 0.0
      %vm1814 = vcmp.ge.f32.partialorder %v1811, 0.0
      %vm1815 = vcmp.ge.f32.partialorder %v1812, 0.0
      %v1816 = vmul.f32 %v1810, 0.01
      %v1817 = vmul.f32 %v1811, 0.01
      %v1818 = vmul.f32 %v1812, 0.01
      %v1819 = vsel %vm1813, %v1810, %v1816
      %v1820 = vsel %vm1814, %v1811, %v1817
      %v1821 = vsel %vm1815, %v1812, %v1818
      %v1822 = vld [vmem:[%s3] sm:$0xff]
      %v1823 = vld [vmem:[%s3 + $0x8] sm:$0xff]
      %v1824 = vld [vmem:[%s4] sm:$0xf]
      %v1825 = vld [vmem:[%s4 + $0x4] sm:$0xf]
      %v1828 = vunpack.c.l.b16 %v1824
      %v1829 = vunpack.c.l.b16 %v1825
      %v1830 = vpack.c.b16 %v1829, %v1828
      %1831 = vrot.lane.b32.xlu0 %v236, 109
      %v1832 = vpop.permute.xlu0 %1831
      %1833 = vrot.lane.b32.xlu0 %v244, 109
      %v1834 = vpop.permute.xlu0 %1833
      %1835 = vrot.lane.b32.xlu0 %v243, 109
      %v1836 = vpop.permute.xlu0 %1835
      %vm1837 = vcmask 891904
      %v1838 = vsel %vm1837, %v1832, %v1834
      %v1839 = vsel %vm1837, %v1834, %v1836
      %v1841 = vsel %vm245, %v1830, 0
      %v1844 = vsel %vm249, %v1838, 0
      %v1847 = vsel %vm249, %v1839, 0
      %v1850 = vsel %vm249, %v1836, 0
      %1852 = vmatprep.subr.bf16.mxu0 0
      %1853 = vmatpush1.bf16.msra.mxu0 0
      %1854 = vmatprep.subr.bf16.mxu0 0
      %1855 = vmatpush1.bf16.msra.mxu0 0
      %1856 = vmatprep.subr.bf16.mxu0 0
      %1857 = vmatpush1.bf16.msra.mxu0 0
      %1858 = vmatprep.subr.bf16.mxu0 0
      %1859 = vmatpush1.bf16.msra.mxu0 0
      %1860 = vmatprep.subr.bf16.mxu0 0
      %1861 = vmatpush1.bf16.msra.mxu0 0
      %1862 = vmatprep.subr.bf16.mxu0 0
      %1863 = vmatpush1.bf16.msra.mxu0 0
      %1864 = vmatprep.subr.bf16.mxu0 0
      %1865 = vmatpush1.bf16.msra.mxu0 0
      %1866 = vmatprep.subr.bf16.mxu0 %v1847
      %1867 = vmatpush1.bf16.msra.mxu0 %v1844
      %1868 = vmatprep.subr.bf16.mxu0 0
      %1869 = vmatpush2.bf16.msra.mxu0 0
      %1870 = vmatprep.subr.bf16.mxu0 0
      %1871 = vmatpush2.bf16.msra.mxu0 0
      %1872 = vmatprep.subr.bf16.mxu0 0
      %1873 = vmatpush2.bf16.msra.mxu0 0
      %1874 = vmatprep.subr.bf16.mxu0 0
      %1875 = vmatpush2.bf16.msra.mxu0 0
      %1876 = vmatprep.subr.bf16.mxu0 0
      %1877 = vmatpush2.bf16.msra.mxu0 0
      %1878 = vmatprep.subr.bf16.mxu0 0
      %1879 = vmatpush2.bf16.msra.mxu0 0
      %1880 = vmatprep.subr.bf16.mxu0 0
      %1881 = vmatpush2.bf16.msra.mxu0 0
      %1882 = vmatprep.subr.bf16.mxu0 0
      %1883 = vmatpush2.bf16.msra.mxu0 0
      %1884 = vmatprep.mubr.bf16.mxu0 0
      %1885 = vmatmul.mubr.bf16.gmra.mxu0 %v1841
      %v1886 = vpop.f32.mrf.mxu0
      %v1887 = vadd.f32 0.0, %v1886
      %v1888 = vpop.f32.mrf.mxu0
      %v1889 = vadd.f32 0.0, %v1888
      %v1890 = vpop.f32.mrf.mxu0
      %v1891 = vadd.f32 0.0, %v1890
      %v1892 = vpop.f32.mrf.mxu0
      %v1893 = vadd.f32 0.0, %v1892
      %1894 = vdwg.mxu0
      %1895 = vmatprep.subr.bf16.mxu0 0
      %1896 = vmatpush1.bf16.msra.mxu0 0
      %1897 = vmatprep.subr.bf16.mxu0 0
      %1898 = vmatpush1.bf16.msra.mxu0 0
      %1899 = vmatprep.subr.bf16.mxu0 0
      %1900 = vmatpush1.bf16.msra.mxu0 0
      %1901 = vmatprep.subr.bf16.mxu0 0
      %1902 = vmatpush1.bf16.msra.mxu0 0
      %1903 = vmatprep.subr.bf16.mxu0 0
      %1904 = vmatpush1.bf16.msra.mxu0 0
      %1905 = vmatprep.subr.bf16.mxu0 0
      %1906 = vmatpush1.bf16.msra.mxu0 0
      %1907 = vmatprep.subr.bf16.mxu0 0
      %1908 = vmatpush1.bf16.msra.mxu0 0
      %1909 = vmatprep.subr.bf16.mxu0 0
      %1910 = vmatpush1.bf16.msra.mxu0 %v1850
      %1911 = vmatprep.subr.bf16.mxu0 0
      %1912 = vmatpush2.bf16.msra.mxu0 0
      %1913 = vmatprep.subr.bf16.mxu0 0
      %1914 = vmatpush2.bf16.msra.mxu0 0
      %1915 = vmatprep.subr.bf16.mxu0 0
      %1916 = vmatpush2.bf16.msra.mxu0 0
      %1917 = vmatprep.subr.bf16.mxu0 0
      %1918 = vmatpush2.bf16.msra.mxu0 0
      %1919 = vmatprep.subr.bf16.mxu0 0
      %1920 = vmatpush2.bf16.msra.mxu0 0
      %1921 = vmatprep.subr.bf16.mxu0 0
      %1922 = vmatpush2.bf16.msra.mxu0 0
      %1923 = vmatprep.subr.bf16.mxu0 0
      %1924 = vmatpush2.bf16.msra.mxu0 0
      %1925 = vmatprep.subr.bf16.mxu0 0
      %1926 = vmatpush2.bf16.msra.mxu0 0
      %1927 = vmatprep.mubr.bf16.mxu0 0
      %1928 = vmatmul.mubr.bf16.gmra.mxu0 %v1841
      %v1929 = vpop.f32.mrf.mxu0
      %v1930 = vadd.f32 0.0, %v1929
      %v1931 = vpop.f32.mrf.mxu0
      %v1932 = vpop.f32.mrf.mxu0
      %v1933 = vadd.f32 0.0, %v1932
      %v1934 = vpop.f32.mrf.mxu0
      %1935 = vdwg.mxu0
      %v1937 = vsel %vm245, %v1822, 0
      %v1940 = vsel %vm245, %v1823, 0
      %v1943 = vsel %vm367, %v1819, 0
      %v1946 = vsel %vm367, %v1820, 0
      %v1949 = vsel %vm367, %v1821, 0
      %1951 = vmatprep.subr.mxu0 0.0
      %1952 = vmatpush1.msra.mxu0 0.0
      %1953 = vmatprep.subr.mxu0 0.0
      %1954 = vmatpush1.msra.mxu0 0.0
      %1955 = vmatprep.subr.mxu0 0.0
      %1956 = vmatpush1.msra.mxu0 0.0
      %1957 = vmatprep.subr.mxu0 0.0
      %1958 = vmatpush1.msra.mxu0 0.0
      %1959 = vmatprep.subr.mxu0 0.0
      %1960 = vmatpush1.msra.mxu0 0.0
      %1961 = vmatprep.subr.mxu0 0.0
      %1962 = vmatpush1.msra.mxu0 0.0
      %1963 = vmatprep.subr.mxu0 0.0
      %1964 = vmatpush1.msra.mxu0 0.0
      %1965 = vmatprep.subr.mxu0 0.0
      %1966 = vmatpush1.msra.mxu0 0.0
      %1967 = vmatprep.subr.mxu0 0.0
      %1968 = vmatpush1.msra.mxu0 0.0
      %1969 = vmatprep.subr.mxu0 0.0
      %1970 = vmatpush1.msra.mxu0 0.0
      %1971 = vmatprep.subr.mxu0 0.0
      %1972 = vmatpush1.msra.mxu0 0.0
      %1973 = vmatprep.subr.mxu0 0.0
      %1974 = vmatpush1.msra.mxu0 0.0
      %1975 = vmatprep.subr.mxu0 0.0
      %1976 = vmatpush1.msra.mxu0 0.0
      %1977 = vmatprep.subr.mxu0 0.0
      %1978 = vmatpush1.msra.mxu0 0.0
      %1979 = vmatprep.subr.mxu0 0.0
      %1980 = vmatpush1.msra.mxu0 0.0
      %1981 = vmatprep.subr.mxu0 %v1946
      %1982 = vmatpush1.msra.mxu0 %v1943
      %1983 = vmatprep.subr.mxu0 0.0
      %1984 = vmatpush2.msra.mxu0 0.0
      %1985 = vmatprep.subr.mxu0 0.0
      %1986 = vmatpush2.msra.mxu0 0.0
      %1987 = vmatprep.subr.mxu0 0.0
      %1988 = vmatpush2.msra.mxu0 0.0
      %1989 = vmatprep.subr.mxu0 0.0
      %1990 = vmatpush2.msra.mxu0 0.0
      %1991 = vmatprep.subr.mxu0 0.0
      %1992 = vmatpush2.msra.mxu0 0.0
      %1993 = vmatprep.subr.mxu0 0.0
      %1994 = vmatpush2.msra.mxu0 0.0
      %1995 = vmatprep.subr.mxu0 0.0
      %1996 = vmatpush2.msra.mxu0 0.0
      %1997 = vmatprep.subr.mxu0 0.0
      %1998 = vmatpush2.msra.mxu0 0.0
      %1999 = vmatprep.subr.mxu0 0.0
      %2000 = vmatpush2.msra.mxu0 0.0
      %2001 = vmatprep.subr.mxu0 0.0
      %2002 = vmatpush2.msra.mxu0 0.0
      %2003 = vmatprep.subr.mxu0 0.0
      %2004 = vmatpush2.msra.mxu0 0.0
      %2005 = vmatprep.subr.mxu0 0.0
      %2006 = vmatpush2.msra.mxu0 0.0
      %2007 = vmatprep.subr.mxu0 0.0
      %2008 = vmatpush2.msra.mxu0 0.0
      %2009 = vmatprep.subr.mxu0 0.0
      %2010 = vmatpush2.msra.mxu0 0.0
      %2011 = vmatprep.subr.mxu0 0.0
      %2012 = vmatpush2.msra.mxu0 0.0
      %2013 = vmatprep.subr.mxu0 0.0
      %2014 = vmatpush2.msra.mxu0 0.0
      %2015 = vmatprep.mubr.f32.mxu0 0.0
      %2016 = vmatmul.mubr.f32.gmra.mxu0 %v1937
      %v2017 = vpop.f32.mrf.mxu0
      %v2018 = vadd.f32 %v1887, %v2017
      %v2019 = vpop.f32.mrf.mxu0
      %v2020 = vadd.f32 %v1889, %v2019
      %2021 = vmatprep.mubr.f32.mxu0 0.0
      %2022 = vmatmul.mubr.f32.gmra.mxu0 %v1940
      %v2023 = vpop.f32.mrf.mxu0
      %v2024 = vadd.f32 %v1891, %v2023
      %v2025 = vpop.f32.mrf.mxu0
      %v2026 = vadd.f32 %v1893, %v2025
      %2027 = vdwg.mxu0
      %2028 = vmatprep.subr.mxu0 0.0
      %2029 = vmatpush1.msra.mxu0 0.0
      %2030 = vmatprep.subr.mxu0 0.0
      %2031 = vmatpush1.msra.mxu0 0.0
      %2032 = vmatprep.subr.mxu0 0.0
      %2033 = vmatpush1.msra.mxu0 0.0
      %2034 = vmatprep.subr.mxu0 0.0
      %2035 = vmatpush1.msra.mxu0 0.0
      %2036 = vmatprep.subr.mxu0 0.0
      %2037 = vmatpush1.msra.mxu0 0.0
      %2038 = vmatprep.subr.mxu0 0.0
      %2039 = vmatpush1.msra.mxu0 0.0
      %2040 = vmatprep.subr.mxu0 0.0
      %2041 = vmatpush1.msra.mxu0 0.0
      %2042 = vmatprep.subr.mxu0 0.0
      %2043 = vmatpush1.msra.mxu0 0.0
      %2044 = vmatprep.subr.mxu0 0.0
      %2045 = vmatpush1.msra.mxu0 0.0
      %2046 = vmatprep.subr.mxu0 0.0
      %2047 = vmatpush1.msra.mxu0 0.0
      %2048 = vmatprep.subr.mxu0 0.0
      %2049 = vmatpush1.msra.mxu0 0.0
      %2050 = vmatprep.subr.mxu0 0.0
      %2051 = vmatpush1.msra.mxu0 0.0
      %2052 = vmatprep.subr.mxu0 0.0
      %2053 = vmatpush1.msra.mxu0 0.0
      %2054 = vmatprep.subr.mxu0 0.0
      %2055 = vmatpush1.msra.mxu0 0.0
      %2056 = vmatprep.subr.mxu0 0.0
      %2057 = vmatpush1.msra.mxu0 0.0
      %2058 = vmatprep.subr.mxu0 0.0
      %2059 = vmatpush1.msra.mxu0 %v1949
      %2060 = vmatprep.subr.mxu0 0.0
      %2061 = vmatpush2.msra.mxu0 0.0
      %2062 = vmatprep.subr.mxu0 0.0
      %2063 = vmatpush2.msra.mxu0 0.0
      %2064 = vmatprep.subr.mxu0 0.0
      %2065 = vmatpush2.msra.mxu0 0.0
      %2066 = vmatprep.subr.mxu0 0.0
      %2067 = vmatpush2.msra.mxu0 0.0
      %2068 = vmatprep.subr.mxu0 0.0
      %2069 = vmatpush2.msra.mxu0 0.0
      %2070 = vmatprep.subr.mxu0 0.0
      %2071 = vmatpush2.msra.mxu0 0.0
      %2072 = vmatprep.subr.mxu0 0.0
      %2073 = vmatpush2.msra.mxu0 0.0
      %2074 = vmatprep.subr.mxu0 0.0
      %2075 = vmatpush2.msra.mxu0 0.0
      %2076 = vmatprep.subr.mxu0 0.0
      %2077 = vmatpush2.msra.mxu0 0.0
      %2078 = vmatprep.subr.mxu0 0.0
      %2079 = vmatpush2.msra.mxu0 0.0
      %2080 = vmatprep.subr.mxu0 0.0
      %2081 = vmatpush2.msra.mxu0 0.0
      %2082 = vmatprep.subr.mxu0 0.0
      %2083 = vmatpush2.msra.mxu0 0.0
      %2084 = vmatprep.subr.mxu0 0.0
      %2085 = vmatpush2.msra.mxu0 0.0
      %2086 = vmatprep.subr.mxu0 0.0
      %2087 = vmatpush2.msra.mxu0 0.0
      %2088 = vmatprep.subr.mxu0 0.0
      %2089 = vmatpush2.msra.mxu0 0.0
      %2090 = vmatprep.subr.mxu0 0.0
      %2091 = vmatpush2.msra.mxu0 0.0
      %2092 = vmatprep.mubr.f32.mxu0 0.0
      %2093 = vmatmul.mubr.f32.gmra.mxu0 %v1937
      %v2094 = vpop.f32.mrf.mxu0
      %v2095 = vadd.f32 %v1930, %v2094
      %v2096 = vpop.f32.mrf.mxu0
      %2097 = vmatprep.mubr.f32.mxu0 0.0
      %2098 = vmatmul.mubr.f32.gmra.mxu0 %v1940
      %v2099 = vpop.f32.mrf.mxu0
      %v2100 = vadd.f32 %v1933, %v2099
      %v2101 = vpop.f32.mrf.mxu0
      %2102 = vdwg.mxu0
      %vm2103 = vcmp.ge.f32.partialorder %v2018, 0.0
      %vm2104 = vcmp.ge.f32.partialorder %v2020, 0.0
      %vm2105 = vcmp.ge.f32.partialorder %v2095, 0.0
      %vm2106 = vcmp.ge.f32.partialorder %v2024, 0.0
      %vm2107 = vcmp.ge.f32.partialorder %v2026, 0.0
      %vm2108 = vcmp.ge.f32.partialorder %v2100, 0.0
      %v2109 = vmul.f32 %v2018, 0.01
      %v2110 = vmul.f32 %v2020, 0.01
      %v2111 = vmul.f32 %v2095, 0.01
      %v2112 = vmul.f32 %v2024, 0.01
      %v2113 = vmul.f32 %v2026, 0.01
      %v2114 = vmul.f32 %v2100, 0.01
      %v2115 = vsel %vm2103, %v2018, %v2109
      %v2116 = vsel %vm2104, %v2020, %v2110
      %v2117 = vsel %vm2105, %v2095, %v2111
      %v2118 = vsel %vm2106, %v2024, %v2112
      %v2119 = vsel %vm2107, %v2026, %v2113
      %v2120 = vsel %vm2108, %v2100, %v2114
      %2121 = vst [vmem:[%s224] sm:$0xff] %v2115
      %2122 = vst [vmem:[%s224 + $0x8] sm:$0xff] %v2116
      %vm2123 = vcmask 261120
      %2124 = vst.msk [vmem:[%s224 + $0x10] sm:$0xff] %vm2123, %v2117
      %2125 = vst [vmem:[%s224 + $0x18] sm:$0xff] %v2118
      %2126 = vst [vmem:[%s224 + $0x20] sm:$0xff] %v2119
      %2127 = vst.msk [vmem:[%s224 + $0x28] sm:$0xff] %vm2123, %v2120
      %p2128 = scmp.lt.s32.totalorder %s16, 1
      %s2129 = scalar_select %p2128, %s16, 1
      %s2130 = smul.addr %s2129, 6
      %s2131 = smul.addr %s2130, 8
      %s2132 = scalar_lea.vmem %s5, %s2131
      // Predicated region
      $region41: #{snres_block_forward.1} parent=39 // pred_check
        %p2133 = pneg %p144
      $region42: #{snres_block_forward.1} parent=39 // pred_check_branch
        %2135 = sbr.rel (%p2133) target = $region44
      $region43: #{snres_block_forward.1} parent=39 // pred_region
        _
      $region44: #{snres_block_forward.1} parent=39 // pred_fallthru
        _
    $region40: #{snres_block_forward.1} parent=5 // pred_fallthru
      _
    %p2136 = scmp.le.s32.totalorder 2, %s11
    // Predicated region
    $region45: #{snres_block_forward.1} parent=5 // pred_check
      %p2137 = pneg %p2136
    $region46: #{snres_block_forward.1} parent=5 // pred_check_branch
      %2139 = sbr.rel (%p2137) target = $region48
    $region47: #{snres_block_forward.1} parent=5 // pred_region
      %s2140 = ssub.s32 %s11, 2
      // Predicated region
      $region49: #{snres_block_forward.1} parent=47 // pred_check
        %p2141 = pneg %p150
      $region50: #{snres_block_forward.1} parent=47 // pred_check_branch
        %2143 = sbr.rel (%p2141) target = $region52
      $region51: #{snres_block_forward.1} parent=47 // pred_region
        %p2144 = scmp.lt.s32.totalorder %s17, 1
        %s2145 = scalar_select %p2144, %s17, 1
        %s2146 = smul.addr %s2145, 6
        %s2147 = smul.addr %s2146, 8
        %s2148 = scalar_lea.vmem %s5, %s2147
      $region52: #{snres_block_forward.1} parent=47 // pred_fallthru
        _
    $region48: #{snres_block_forward.1} parent=5 // pred_fallthru
      _
  $region6: #{snres_block_forward.1} parent=0 // loop_footer
    %s15 = sadd.s32 1, %s11
  $region7: #{snres_block_forward.1} parent=0 // loop_footer_branch
    %10 = sbr.rel target = $region3
  $region8: #{snres_block_forward.1} parent=0 // loop_exit
    _

</llo_original>
